<compile_context>
chip_gen: v6e
topology: v6e:2x2x1
jax: 0.10.0
libtpu: 0.0.40
codegen_flags: <defaults>
</compile_context>

<pallas_src>
import functools

import jax
import jax.numpy as jnp
from jax import lax
from jax.experimental import pallas as pl
from jax.experimental.pallas import tpu as pltpu

# ----------------------------- configuration -----------------------------
K = 4          # number of slots (mask is K x 1 x H x W)
IN_DIM = 32
OUT_DIM = 32
H = W = 16
EPS = 1e-5     # matches the 1e-05 in the PyTorch module


def build_grid(h, w):
    # TODO(synk): build_grid() is not defined in the provided source; using the
    # standard uORF pixel-center grid in [-1, 1], channels ordered [x, y].
    x = jnp.linspace(-1.0 + 1.0 / w, 1.0 - 1.0 / w, w, dtype=jnp.float32)
    y = jnp.linspace(-1.0 + 1.0 / h, 1.0 - 1.0 / h, h, dtype=jnp.float32)
    yy, xx = jnp.meshgrid(y, x, indexing="ij")
    return jnp.stack([xx, yy], axis=-1).reshape(h * w, 2)          # (N, 2)


# ----------------------------- Pallas kernel ------------------------------
def feature_aggregate_kernel(x_ref, tapmask_ref, gext_ref, sel_ref,
                             w1_ref, b1_ref, w2_ref, b2_ref,
                             xout_ref, pos_ref, *, offs, use_mask, eps):
    """conv->ReLU->conv->pooling + fg-position for one block of slots.

    Shapes (per grid step, NB = KB*H*W lanes):
      x_ref       (Cin, NB)        activations, channels on sublanes, lane-dense
      tapmask_ref (9, NB)          boundary-validity mask of each 3x3 tap
      gext_ref    (3, NB)          [grid_x; grid_y; ones] rows
      sel_ref     (NB, 2*KB)       [:, :KB]  per-slot mask values
                                   [:, KB:]  per-slot 1/(H*W) indicator (mean pool)
      w1_ref      (Cin, 9*Cin)     fused-contraction conv1 weight
      w2_ref      (Cout, 9*Cin)    fused-contraction conv2 weight
      xout_ref    (Cout, KB)       pooled features (transposed; wrapper fixes)
      pos_ref     (2, KB)          fg positions    (transposed; wrapper fixes)
    """
    Cin, NB = x_ref.shape
    Cout = w2_ref.shape[0]
    KB = sel_ref.shape[1] // 2

    # Hoist the tap-mask sublane broadcasts once; reused by both convs.
    tapmask = tapmask_ref[...]                                        # (9, NB)
    masks = [jnp.broadcast_to(tapmask[t:t + 1, :], (Cin, NB)) for t in range(9)]

    def im2col(act):
        # 3x3 taps as lane rotations (XLU) + boundary masks -> (9*Cin, NB) slab.
        taps = []
        for t, off in enumerate(offs):
            shifted = act if off == 0 else pltpu.roll(act, shift=(-off) % NB, axis=1)
            taps.append(shifted * masks[t])
        return jnp.concatenate(taps, axis=0)

    # ---- conv1 (3x3, pad=1): single (Cin, 9*Cin) @ (9*Cin, NB) MXU matmul ----
    h1 = jnp.dot(w1_ref[...], im2col(x_ref[...]),
                 preferred_element_type=jnp.float32) + b1_ref[...]
    h1 = jnp.maximum(h1, 0.0)                                         # (Cin, NB)

    # ---- conv2 (3x3, pad=1) ----
    feat = jnp.dot(w2_ref[...], im2col(h1),
                   preferred_element_type=jnp.float32) + b2_ref[...]  # (Cout, NB)

    # ---- pooling + fg_position + mask sums fused into one matmul drain -------
    combined = jnp.concatenate([feat, gext_ref[...]], axis=0)         # (Cout+3, NB)
    num = jnp.dot(combined, sel_ref[...],
                  preferred_element_type=jnp.float32)                 # (Cout+3, 2*KB)

    denom = num[Cout + 2:Cout + 3, :KB] + eps                         # (1, KB) mask sums
    if use_mask:
        xout_ref[...] = num[:Cout, :KB] / denom                       # masked mean
    else:
        xout_ref[...] = num[:Cout, KB:2 * KB]                         # plain average pool
    pos_ref[...] = num[Cout:Cout + 2, :KB] / denom                    # mask-weighted grid mean


# ----------------------------- forward wrapper ----------------------------
@functools.partial(jax.jit, static_argnames=("use_mask",))
def feature_aggregate_forward(x, mask, params, use_mask=True, x_color=None):
    """x: (K, Cin, H, W), mask: (K, 1, H, W) -> ((K, Cout), (K, 2))."""
    if x_color is not None:
        # matches `torch.cat([x, x_color], dim=1)`; conv1 must be sized accordingly.
        x = jnp.concatenate([x, x_color], axis=1)

    Kn, Cin, Hh, Ww = x.shape
    HW = Hh * Ww
    C1 = params["conv1_w"].shape[0]
    Cout = params["conv2_w"].shape[0]
    assert params["conv1_w"].shape[1] == Cin and C1 == Cin, "conv1 must be Cin->Cin"
    assert params["conv2_w"].shape[1] == Cin, "conv2 input channels must match conv1 output"

    # Slot-blocked grid so v7x can shard across both TensorCores.
    if Kn % 2 == 0 and ((Kn // 2) * HW) % 128 == 0:
        KB = Kn // 2
    else:
        KB = Kn
    NBLK = Kn // KB
    NB = KB * HW

    # -- lane-dense activation slab: channels on sublanes, (slot,y,x) on lanes --
    x_cn = jnp.transpose(x.reshape(Kn, Cin, HW), (1, 0, 2)).reshape(Cin, Kn * HW)
    x_cn = x_cn.astype(jnp.float32)

    # -- 3x3 tap lane-offsets and their boundary validity masks (9, NB) --------
    offs = tuple((dy - 1) * Ww + (dx - 1) for dy in range(3) for dx in range(3))
    yy, xx = jnp.meshgrid(jnp.arange(Hh), jnp.arange(Ww), indexing="ij")
    tap_valid = []
    for dy in range(3):
        for dx in range(3):
            v = ((yy + dy - 1 >= 0) & (yy + dy - 1 < Hh) &
                 (xx + dx - 1 >= 0) & (xx + dx - 1 < Ww))
            tap_valid.append(v.reshape(HW))
    tapmask = jnp.stack(tap_valid, axis=0).astype(jnp.float32)        # (9, HW)
    tapmask = jnp.tile(tapmask, (1, KB))                              # (9, NB)

    # -- conv weights (O, I, 3, 3) -> fused-contraction (O, 9*I) matrices ------
    w1 = jnp.transpose(params["conv1_w"], (0, 2, 3, 1)).reshape(C1, 9 * Cin).astype(jnp.float32)
    b1 = params["conv1_b"].reshape(C1, 1).astype(jnp.float32)
    w2 = jnp.transpose(params["conv2_w"], (0, 2, 3, 1)).reshape(Cout, 9 * C1).astype(jnp.float32)
    b2 = params["conv2_b"].reshape(Cout, 1).astype(jnp.float32)

    # -- extra matmul rows: [grid_x; grid_y; ones], tiled per slot -> (3, NB) ---
    grid2 = build_grid(Hh, Ww)                                        # (HW, 2)
    gext = jnp.concatenate([jnp.tile(grid2.T, (1, KB)),
                            jnp.ones((1, NB), jnp.float32)], axis=0)  # (3, NB)

    # -- per-block pooling selection matrices (NBLK, NB, 2*KB) -----------------
    mask_blk = mask.reshape(NBLK, KB, HW).astype(jnp.float32)
    eye = jnp.eye(KB, dtype=jnp.float32)
    sel_mask = (mask_blk[:, :, :, None] * eye[None, :, None, :]).reshape(NBLK, NB, KB)
    sel_mean = jnp.broadcast_to(eye[:, None, :] / HW, (KB, HW, KB)).reshape(1, NB, KB)
    sel_mean = jnp.broadcast_to(sel_mean, (NBLK, NB, KB))
    sel = jnp.concatenate([sel_mask, sel_mean], axis=-1)              # (NBLK, NB, 2*KB)

    out_shape = (jax.ShapeDtypeStruct((NBLK, Cout, KB), jnp.float32),
                 jax.ShapeDtypeStruct((NBLK, 2, KB), jnp.float32))

    xout_t, pos_t = pl.pallas_call(
        functools.partial(feature_aggregate_kernel, offs=offs, use_mask=use_mask, eps=EPS),
        out_shape=out_shape,
        grid=(NBLK,),
        in_specs=[
            pl.BlockSpec((Cin, NB), lambda b: (0, b)),          # activations
            pl.BlockSpec((9, NB), lambda b: (0, 0)),            # tap masks (block-invariant)
            pl.BlockSpec((3, NB), lambda b: (0, 0)),            # grid+ones rows
            pl.BlockSpec((None, NB, 2 * KB), lambda b: (b, 0, 0)),   # pooling selectors
            pl.BlockSpec((C1, 9 * Cin), lambda b: (0, 0)),      # conv1 weight
            pl.BlockSpec((C1, 1), lambda b: (0, 0)),            # conv1 bias
            pl.BlockSpec((Cout, 9 * C1), lambda b: (0, 0)),     # conv2 weight
            pl.BlockSpec((Cout, 1), lambda b: (0, 0)),          # conv2 bias
        ],
        out_specs=(
            pl.BlockSpec((None, Cout, KB), lambda b: (b, 0, 0)),
            pl.BlockSpec((None, 2, KB), lambda b: (b, 0, 0)),
        ),
        compiler_params=pltpu.CompilerParams(dimension_semantics=("parallel",)),
    )(x_cn, tapmask, gext, sel, w1, b1, w2, b2)

    x_agg = jnp.transpose(xout_t, (0, 2, 1)).reshape(Kn, Cout)
    fg_position = jnp.transpose(pos_t, (0, 2, 1)).reshape(Kn, 2)
    return x_agg, fg_position


# ----------------------------- pure-JAX reference -------------------------
def reference_forward(x, mask, params, use_mask=True):
    dn = ("NCHW", "OIHW", "NCHW")
    h = lax.conv_general_dilated(x, params["conv1_w"], (1, 1), "SAME",
                                 dimension_numbers=dn, precision=lax.Precision.HIGHEST)
    h = jnp.maximum(h + params["conv1_b"].reshape(1, -1, 1, 1), 0.0)
    h = lax.conv_general_dilated(h, params["conv2_w"], (1, 1), "SAME",
                                 dimension_numbers=dn, precision=lax.Precision.HIGHEST)
    h = h + params["conv2_b"].reshape(1, -1, 1, 1)

    msum = mask.sum(axis=(2, 3)) + EPS                              # (K, 1)
    if use_mask:
        x_out = (h * mask).sum(axis=(2, 3)) / msum
    else:
        x_out = h.mean(axis=(2, 3))

    Kb, _, Hh, Ww = mask.shape
    grid = build_grid(Hh, Ww).reshape(1, Hh, Ww, 2).transpose(0, 3, 1, 2)  # (1,2,H,W)
    pos = (grid * mask).sum(axis=(2, 3)) / msum
    return x_out, pos


# ----------------------------- parameter init -----------------------------
def init_params(key):
    k1, k2, k3, k4 = jax.random.split(key, 4)
    return {
        "conv1_w": 0.1 * jax.random.normal(k1, (IN_DIM, IN_DIM, 3, 3), jnp.float32),
        "conv1_b": 0.05 * jax.random.normal(k2, (IN_DIM,), jnp.float32),
        "conv2_w": 0.1 * jax.random.normal(k3, (OUT_DIM, IN_DIM, 3, 3), jnp.float32),
        "conv2_b": 0.05 * jax.random.normal(k4, (OUT_DIM,), jnp.float32),
    }


# ----------------------------- main ----------------------------------------
if __name__ == "__main__":
    key = jax.random.PRNGKey(0)
    kx, km, kp = jax.random.split(key, 3)
    params = init_params(kp)
    x = jax.random.normal(kx, (K, IN_DIM, H, W), dtype=jnp.float32)
    mask = jax.random.uniform(km, (K, 1, H, W), dtype=jnp.float32)

    # masked-pooling branch (default in uORF)
    x_agg, fg_pos = feature_aggregate_forward(x, mask, params, use_mask=True)
    jax.block_until_ready((x_agg, fg_pos))
    x_ref_out, pos_ref_out = reference_forward(x, mask, params, use_mask=True)

    assert x_agg.shape == (K, OUT_DIM)
    assert fg_pos.shape == (K, 2)
    assert bool(jnp.all(jnp.isfinite(x_agg)))
    assert bool(jnp.all(jnp.isfinite(fg_pos)))
    assert bool(jnp.allclose(x_agg, x_ref_out, rtol=2e-3, atol=2e-3))
    assert bool(jnp.allclose(fg_pos, pos_ref_out, rtol=2e-3, atol=2e-3))

    # global-average-pool branch
    x_agg2, fg_pos2 = feature_aggregate_forward(x, mask, params, use_mask=False)
    jax.block_until_ready((x_agg2, fg_pos2))
    x_ref2, pos_ref2 = reference_forward(x, mask, params, use_mask=False)
    assert bool(jnp.allclose(x_agg2, x_ref2, rtol=2e-3, atol=2e-3))
    assert bool(jnp.allclose(fg_pos2, pos_ref2, rtol=2e-3, atol=2e-3))

    print("KERNEL_OK")
</pallas_src>

<mosaic_0001>
module attributes {stable_mosaic.version = 11 : i64} {
  func.func @feature_aggregate_kernel(%arg0: i32, %arg1: memref<32x512xf32, #tpu.memory_space<vmem>>, %arg2: memref<9x512xf32, #tpu.memory_space<vmem>>, %arg3: memref<3x512xf32, #tpu.memory_space<vmem>>, %arg4: memref<1x512x4xf32, #tpu.memory_space<vmem>>, %arg5: memref<32x288xf32, #tpu.memory_space<vmem>>, %arg6: memref<32x1xf32, #tpu.memory_space<vmem>>, %arg7: memref<32x288xf32, #tpu.memory_space<vmem>>, %arg8: memref<32x1xf32, #tpu.memory_space<vmem>>, %arg9: memref<1x32x2xf32, #tpu.memory_space<vmem>>, %arg10: memref<1x2x2xf32, #tpu.memory_space<vmem>>) attributes {dimension_semantics = [#tpu.dimension_semantics<parallel>], iteration_bounds = array<i64: 2>, scalar_prefetch = 0 : i64, scratch_operands = 0 : i64, tpu.core_type = #tpu.core_type<tc>, window_params = [{transform_indices = @transform_0, window_bounds = array<i64: 32, 512>}, {pipeline_mode = #tpu.pipeline_mode<synchronous>, transform_indices = @transform_1, window_bounds = array<i64: 9, 512>}, {pipeline_mode = #tpu.pipeline_mode<synchronous>, transform_indices = @transform_2, window_bounds = array<i64: 3, 512>}, {transform_indices = @transform_3, window_bounds = array<i64: 1, 512, 4>}, {pipeline_mode = #tpu.pipeline_mode<synchronous>, transform_indices = @transform_4, window_bounds = array<i64: 32, 288>}, {pipeline_mode = #tpu.pipeline_mode<synchronous>, transform_indices = @transform_5, window_bounds = array<i64: 32, 1>}, {pipeline_mode = #tpu.pipeline_mode<synchronous>, transform_indices = @transform_6, window_bounds = array<i64: 32, 288>}, {pipeline_mode = #tpu.pipeline_mode<synchronous>, transform_indices = @transform_7, window_bounds = array<i64: 32, 1>}, {transform_indices = @transform_8, window_bounds = array<i64: 1, 32, 2>}, {transform_indices = @transform_9, window_bounds = array<i64: 1, 2, 2>}]} {
    %c0 = arith.constant 0 : index
    %c0_0 = arith.constant 0 : index
    %0 = vector.load %arg2[%c0, %c0_0] : memref<9x512xf32, #tpu.memory_space<vmem>>, vector<9x512xf32>
    %1 = vector.extract_strided_slice %0 {offsets = [0, 0], sizes = [1, 512], strides = [1, 1]} : vector<9x512xf32> to vector<1x512xf32>
    %2 = vector.shape_cast %1 : vector<1x512xf32> to vector<1x512xf32>
    %3 = vector.broadcast %2 : vector<1x512xf32> to vector<32x512xf32>
    %4 = vector.extract_strided_slice %0 {offsets = [1, 0], sizes = [1, 512], strides = [1, 1]} : vector<9x512xf32> to vector<1x512xf32>
    %5 = vector.shape_cast %4 : vector<1x512xf32> to vector<1x512xf32>
    %6 = vector.broadcast %5 : vector<1x512xf32> to vector<32x512xf32>
    %7 = vector.extract_strided_slice %0 {offsets = [2, 0], sizes = [1, 512], strides = [1, 1]} : vector<9x512xf32> to vector<1x512xf32>
    %8 = vector.shape_cast %7 : vector<1x512xf32> to vector<1x512xf32>
    %9 = vector.broadcast %8 : vector<1x512xf32> to vector<32x512xf32>
    %10 = vector.extract_strided_slice %0 {offsets = [3, 0], sizes = [1, 512], strides = [1, 1]} : vector<9x512xf32> to vector<1x512xf32>
    %11 = vector.shape_cast %10 : vector<1x512xf32> to vector<1x512xf32>
    %12 = vector.broadcast %11 : vector<1x512xf32> to vector<32x512xf32>
    %13 = vector.extract_strided_slice %0 {offsets = [4, 0], sizes = [1, 512], strides = [1, 1]} : vector<9x512xf32> to vector<1x512xf32>
    %14 = vector.shape_cast %13 : vector<1x512xf32> to vector<1x512xf32>
    %15 = vector.broadcast %14 : vector<1x512xf32> to vector<32x512xf32>
    %16 = vector.extract_strided_slice %0 {offsets = [5, 0], sizes = [1, 512], strides = [1, 1]} : vector<9x512xf32> to vector<1x512xf32>
    %17 = vector.shape_cast %16 : vector<1x512xf32> to vector<1x512xf32>
    %18 = vector.broadcast %17 : vector<1x512xf32> to vector<32x512xf32>
    %19 = vector.extract_strided_slice %0 {offsets = [6, 0], sizes = [1, 512], strides = [1, 1]} : vector<9x512xf32> to vector<1x512xf32>
    %20 = vector.shape_cast %19 : vector<1x512xf32> to vector<1x512xf32>
    %21 = vector.broadcast %20 : vector<1x512xf32> to vector<32x512xf32>
    %22 = vector.extract_strided_slice %0 {offsets = [7, 0], sizes = [1, 512], strides = [1, 1]} : vector<9x512xf32> to vector<1x512xf32>
    %23 = vector.shape_cast %22 : vector<1x512xf32> to vector<1x512xf32>
    %24 = vector.broadcast %23 : vector<1x512xf32> to vector<32x512xf32>
    %25 = vector.extract_strided_slice %0 {offsets = [8, 0], sizes = [1, 512], strides = [1, 1]} : vector<9x512xf32> to vector<1x512xf32>
    %26 = vector.shape_cast %25 : vector<1x512xf32> to vector<1x512xf32>
    %27 = vector.broadcast %26 : vector<1x512xf32> to vector<32x512xf32>
    %c0_1 = arith.constant 0 : index
    %c0_2 = arith.constant 0 : index
    %28 = vector.load %arg5[%c0_1, %c0_2] : memref<32x288xf32, #tpu.memory_space<vmem>>, vector<32x288xf32>
    %c0_3 = arith.constant 0 : index
    %c0_4 = arith.constant 0 : index
    %29 = vector.load %arg1[%c0_3, %c0_4] : memref<32x512xf32, #tpu.memory_space<vmem>>, vector<32x512xf32>
    %c17_i32 = arith.constant 17 : i32
    %30 = tpu.dynamic_rotate %29 by %c17_i32 dim 1 : vector<32x512xf32>, i32 -> vector<32x512xf32>
    %31 = arith.mulf %30, %3 : vector<32x512xf32>
    %c16_i32 = arith.constant 16 : i32
    %32 = tpu.dynamic_rotate %29 by %c16_i32 dim 1 : vector<32x512xf32>, i32 -> vector<32x512xf32>
    %33 = arith.mulf %32, %6 : vector<32x512xf32>
    %c15_i32 = arith.constant 15 : i32
    %34 = tpu.dynamic_rotate %29 by %c15_i32 dim 1 : vector<32x512xf32>, i32 -> vector<32x512xf32>
    %35 = arith.mulf %34, %9 : vector<32x512xf32>
    %c1_i32 = arith.constant 1 : i32
    %36 = tpu.dynamic_rotate %29 by %c1_i32 dim 1 : vector<32x512xf32>, i32 -> vector<32x512xf32>
    %37 = arith.mulf %36, %12 : vector<32x512xf32>
    %38 = arith.mulf %29, %15 : vector<32x512xf32>
    %c511_i32 = arith.constant 511 : i32
    %39 = tpu.dynamic_rotate %29 by %c511_i32 dim 1 : vector<32x512xf32>, i32 -> vector<32x512xf32>
    %40 = arith.mulf %39, %18 : vector<32x512xf32>
    %c497_i32 = arith.constant 497 : i32
    %41 = tpu.dynamic_rotate %29 by %c497_i32 dim 1 : vector<32x512xf32>, i32 -> vector<32x512xf32>
    %42 = arith.mulf %41, %21 : vector<32x512xf32>
    %c496_i32 = arith.constant 496 : i32
    %43 = tpu.dynamic_rotate %29 by %c496_i32 dim 1 : vector<32x512xf32>, i32 -> vector<32x512xf32>
    %44 = arith.mulf %43, %24 : vector<32x512xf32>
    %c495_i32 = arith.constant 495 : i32
    %45 = tpu.dynamic_rotate %29 by %c495_i32 dim 1 : vector<32x512xf32>, i32 -> vector<32x512xf32>
    %46 = arith.mulf %45, %27 : vector<32x512xf32>
    %47 = tpu.concatenate %31, %33, %35, %37, %38, %40, %42, %44, %46 in 0 : vector<32x512xf32>, vector<32x512xf32>, vector<32x512xf32>, vector<32x512xf32>, vector<32x512xf32>, vector<32x512xf32>, vector<32x512xf32>, vector<32x512xf32>, vector<32x512xf32> -> vector<288x512xf32>
    %cst = arith.constant dense<0.000000e+00> : vector<32x512xf32>
    %48 = tpu.matmul %28, %47, %cst {dimension_numbers = #tpu.dot_dimension_numbers<[1], [0], [0], [1], [0, 0, 1, 1], [], []>} : vector<32x288xf32>, vector<288x512xf32>, vector<32x512xf32> -> vector<32x512xf32>
    %c0_5 = arith.constant 0 : index
    %c0_6 = arith.constant 0 : index
    %49 = vector.load %arg6[%c0_5, %c0_6] : memref<32x1xf32, #tpu.memory_space<vmem>>, vector<32x1xf32>
    %50 = vector.broadcast %49 : vector<32x1xf32> to vector<32x512xf32>
    %51 = arith.addf %48, %50 : vector<32x512xf32>
    %cst_7 = arith.constant 0.000000e+00 : f32
    %52 = vector.broadcast %cst_7 : f32 to vector<32x512xf32>
    %53 = arith.maximumf %51, %52 : vector<32x512xf32>
    %c0_8 = arith.constant 0 : index
    %c0_9 = arith.constant 0 : index
    %54 = vector.load %arg7[%c0_8, %c0_9] : memref<32x288xf32, #tpu.memory_space<vmem>>, vector<32x288xf32>
    %c17_i32_10 = arith.constant 17 : i32
    %55 = tpu.dynamic_rotate %53 by %c17_i32_10 dim 1 : vector<32x512xf32>, i32 -> vector<32x512xf32>
    %56 = arith.mulf %55, %3 : vector<32x512xf32>
    %c16_i32_11 = arith.constant 16 : i32
    %57 = tpu.dynamic_rotate %53 by %c16_i32_11 dim 1 : vector<32x512xf32>, i32 -> vector<32x512xf32>
    %58 = arith.mulf %57, %6 : vector<32x512xf32>
    %c15_i32_12 = arith.constant 15 : i32
    %59 = tpu.dynamic_rotate %53 by %c15_i32_12 dim 1 : vector<32x512xf32>, i32 -> vector<32x512xf32>
    %60 = arith.mulf %59, %9 : vector<32x512xf32>
    %c1_i32_13 = arith.constant 1 : i32
    %61 = tpu.dynamic_rotate %53 by %c1_i32_13 dim 1 : vector<32x512xf32>, i32 -> vector<32x512xf32>
    %62 = arith.mulf %61, %12 : vector<32x512xf32>
    %63 = arith.mulf %53, %15 : vector<32x512xf32>
    %c511_i32_14 = arith.constant 511 : i32
    %64 = tpu.dynamic_rotate %53 by %c511_i32_14 dim 1 : vector<32x512xf32>, i32 -> vector<32x512xf32>
    %65 = arith.mulf %64, %18 : vector<32x512xf32>
    %c497_i32_15 = arith.constant 497 : i32
    %66 = tpu.dynamic_rotate %53 by %c497_i32_15 dim 1 : vector<32x512xf32>, i32 -> vector<32x512xf32>
    %67 = arith.mulf %66, %21 : vector<32x512xf32>
    %c496_i32_16 = arith.constant 496 : i32
    %68 = tpu.dynamic_rotate %53 by %c496_i32_16 dim 1 : vector<32x512xf32>, i32 -> vector<32x512xf32>
    %69 = arith.mulf %68, %24 : vector<32x512xf32>
    %c495_i32_17 = arith.constant 495 : i32
    %70 = tpu.dynamic_rotate %53 by %c495_i32_17 dim 1 : vector<32x512xf32>, i32 -> vector<32x512xf32>
    %71 = arith.mulf %70, %27 : vector<32x512xf32>
    %72 = tpu.concatenate %56, %58, %60, %62, %63, %65, %67, %69, %71 in 0 : vector<32x512xf32>, vector<32x512xf32>, vector<32x512xf32>, vector<32x512xf32>, vector<32x512xf32>, vector<32x512xf32>, vector<32x512xf32>, vector<32x512xf32>, vector<32x512xf32> -> vector<288x512xf32>
    %cst_18 = arith.constant dense<0.000000e+00> : vector<32x512xf32>
    %73 = tpu.matmul %54, %72, %cst_18 {dimension_numbers = #tpu.dot_dimension_numbers<[1], [0], [0], [1], [0, 0, 1, 1], [], []>} : vector<32x288xf32>, vector<288x512xf32>, vector<32x512xf32> -> vector<32x512xf32>
    %c0_19 = arith.constant 0 : index
    %c0_20 = arith.constant 0 : index
    %74 = vector.load %arg8[%c0_19, %c0_20] : memref<32x1xf32, #tpu.memory_space<vmem>>, vector<32x1xf32>
    %75 = vector.broadcast %74 : vector<32x1xf32> to vector<32x512xf32>
    %76 = arith.addf %73, %75 : vector<32x512xf32>
    %c0_21 = arith.constant 0 : index
    %c0_22 = arith.constant 0 : index
    %77 = vector.load %arg3[%c0_21, %c0_22] : memref<3x512xf32, #tpu.memory_space<vmem>>, vector<3x512xf32>
    %78 = tpu.concatenate %76, %77 in 0 : vector<32x512xf32>, vector<3x512xf32> -> vector<35x512xf32>
    %c0_23 = arith.constant 0 : index
    %c0_24 = arith.constant 0 : index
    %c0_25 = arith.constant 0 : index
    %79 = vector.load %arg4[%c0_23, %c0_24, %c0_25] : memref<1x512x4xf32, #tpu.memory_space<vmem>>, vector<1x512x4xf32>
    %80 = vector.shape_cast %79 : vector<1x512x4xf32> to vector<512x4xf32>
    %cst_26 = arith.constant dense<0.000000e+00> : vector<35x4xf32>
    %81 = tpu.matmul %78, %80, %cst_26 {dimension_numbers = #tpu.dot_dimension_numbers<[1], [0], [0], [1], [0, 0, 1, 1], [], []>} : vector<35x512xf32>, vector<512x4xf32>, vector<35x4xf32> -> vector<35x4xf32>
    %82 = vector.extract_strided_slice %81 {offsets = [34, 0], sizes = [1, 2], strides = [1, 1]} : vector<35x4xf32> to vector<1x2xf32>
    %cst_27 = arith.constant 9.99999974E-6 : f32
    %83 = vector.broadcast %cst_27 : f32 to vector<1x2xf32>
    %84 = arith.addf %82, %83 : vector<1x2xf32>
    %85 = vector.extract_strided_slice %81 {offsets = [0, 0], sizes = [32, 2], strides = [1, 1]} : vector<35x4xf32> to vector<32x2xf32>
    %86 = vector.broadcast %84 : vector<1x2xf32> to vector<32x2xf32>
    %87 = arith.divf %85, %86 : vector<32x2xf32>
    %c0_28 = arith.constant 0 : index
    %c0_29 = arith.constant 0 : index
    %c0_30 = arith.constant 0 : index
    %88 = vector.load %arg9[%c0_28, %c0_29, %c0_30] : memref<1x32x2xf32, #tpu.memory_space<vmem>>, vector<1x32x2xf32>
    %89 = vector.shape_cast %88 : vector<1x32x2xf32> to vector<32x2xf32>
    %90 = vector.shape_cast %87 : vector<32x2xf32> to vector<1x32x2xf32>
    tpu.vector_store %arg9[%c0_28, %c0_29, %c0_30], %90 {strides = array<i32>} : memref<1x32x2xf32, #tpu.memory_space<vmem>>, vector<1x32x2xf32>,
    %91 = vector.extract_strided_slice %81 {offsets = [32, 0], sizes = [2, 2], strides = [1, 1]} : vector<35x4xf32> to vector<2x2xf32>
    %92 = vector.broadcast %84 : vector<1x2xf32> to vector<2x2xf32>
    %93 = arith.divf %91, %92 : vector<2x2xf32>
    %c0_31 = arith.constant 0 : index
    %c0_32 = arith.constant 0 : index
    %c0_33 = arith.constant 0 : index
    %94 = vector.load %arg10[%c0_31, %c0_32, %c0_33] : memref<1x2x2xf32, #tpu.memory_space<vmem>>, vector<1x2x2xf32>
    %95 = vector.shape_cast %94 : vector<1x2x2xf32> to vector<2x2xf32>
    %96 = vector.shape_cast %93 : vector<2x2xf32> to vector<1x2x2xf32>
    tpu.vector_store %arg10[%c0_31, %c0_32, %c0_33], %96 {strides = array<i32>} : memref<1x2x2xf32, #tpu.memory_space<vmem>>, vector<1x2x2xf32>,
    return
  }
  func.func @transform_0(%arg0: i32) -> (i32, i32) {
    %c0_i32 = arith.constant 0 : i32
    %c0_i32_0 = arith.constant 0 : i32
    return %c0_i32, %arg0 : i32, i32
  }
  func.func @transform_1(%arg0: i32) -> (i32, i32) {
    %c0_i32 = arith.constant 0 : i32
    %c0_i32_0 = arith.constant 0 : i32
    %c0_i32_1 = arith.constant 0 : i32
    return %c0_i32, %c0_i32_0 : i32, i32
  }
  func.func @transform_2(%arg0: i32) -> (i32, i32) {
    %c0_i32 = arith.constant 0 : i32
    %c0_i32_0 = arith.constant 0 : i32
    %c0_i32_1 = arith.constant 0 : i32
    return %c0_i32, %c0_i32_0 : i32, i32
  }
  func.func @transform_3(%arg0: i32) -> (i32, i32, i32) {
    %c0_i32 = arith.constant 0 : i32
    %c0_i32_0 = arith.constant 0 : i32
    %c0_i32_1 = arith.constant 0 : i32
    return %arg0, %c0_i32, %c0_i32_0 : i32, i32, i32
  }
  func.func @transform_4(%arg0: i32) -> (i32, i32) {
    %c0_i32 = arith.constant 0 : i32
    %c0_i32_0 = arith.constant 0 : i32
    %c0_i32_1 = arith.constant 0 : i32
    return %c0_i32, %c0_i32_0 : i32, i32
  }
  func.func @transform_5(%arg0: i32) -> (i32, i32) {
    %c0_i32 = arith.constant 0 : i32
    %c0_i32_0 = arith.constant 0 : i32
    %c0_i32_1 = arith.constant 0 : i32
    return %c0_i32, %c0_i32_0 : i32, i32
  }
  func.func @transform_6(%arg0: i32) -> (i32, i32) {
    %c0_i32 = arith.constant 0 : i32
    %c0_i32_0 = arith.constant 0 : i32
    %c0_i32_1 = arith.constant 0 : i32
    return %c0_i32, %c0_i32_0 : i32, i32
  }
  func.func @transform_7(%arg0: i32) -> (i32, i32) {
    %c0_i32 = arith.constant 0 : i32
    %c0_i32_0 = arith.constant 0 : i32
    %c0_i32_1 = arith.constant 0 : i32
    return %c0_i32, %c0_i32_0 : i32, i32
  }
  func.func @transform_8(%arg0: i32) -> (i32, i32, i32) {
    %c0_i32 = arith.constant 0 : i32
    %c0_i32_0 = arith.constant 0 : i32
    %c0_i32_1 = arith.constant 0 : i32
    return %arg0, %c0_i32, %c0_i32_0 : i32, i32, i32
  }
  func.func @transform_9(%arg0: i32) -> (i32, i32, i32) {
    %c0_i32 = arith.constant 0 : i32
    %c0_i32_0 = arith.constant 0 : i32
    %c0_i32_1 = arith.constant 0 : i32
    return %arg0, %c0_i32, %c0_i32_0 : i32, i32, i32
  }
}

</mosaic_0001>

<llo_original>
// kernel: feature_aggregate_forward.1
$region0: #{feature_aggregate_forward.1}
  #allocation0 [shape = 'u32[]', space=smem, size = 0x4, offset = 0x4, fixed_abs, tag = 'smem constant byte address 0x4 - core index']
  #allocation1 [shape = 'u32[144,128]{1,0:T(1,128)}', space=vmem, size = 0x12000, scoped, tag = 'internal scratch']
  %s0 = inlined_call_operand.vmem [shape: f32[32,1024], index: 0, kind: input, shape index: {}]
  %s1 = inlined_call_operand.vmem [shape: f32[9,512], index: 1, kind: input, shape index: {}]
  %s2 = inlined_call_operand.vmem [shape: f32[3,512], index: 2, kind: input, shape index: {}]
  %s3 = inlined_call_operand.vmem [shape: f32[2,512,4], index: 3, kind: input, shape index: {}]
  %s4 = inlined_call_operand.vmem [shape: f32[32,288], index: 4, kind: input, shape index: {}]
  %s5 = inlined_call_operand.vmem [shape: f32[32,1], index: 5, kind: input, shape index: {}]
  %s6 = inlined_call_operand.vmem [shape: f32[32,288], index: 6, kind: input, shape index: {}]
  %s7 = inlined_call_operand.vmem [shape: f32[32,1], index: 7, kind: input, shape index: {}]
  %s8 = inlined_call_operand.vmem [shape: f32[2,32,2], index: 8, kind: output, shape index: {0}]
  %s9 = inlined_call_operand.vmem [shape: f32[2,2,2], index: 9, kind: output, shape index: {1}]
  %10 = xla_tuple %s8, %s9
  %s11 = sld [smem:[#allocation0]]
  $region96: #{feature_aggregate_forward.1} parent=0
    _
  %s13 = ssub.s32 1, %s11
  %s14 = scalar_select 0, %s13, %s11
  $region1: #{feature_aggregate_forward.1} parent=0
    #allocation2 [shape = 'u8[131072]{0}', space=vmem, size = 0x20000, scoped, tag = 'input window, operand 0']
    loop: start=0, step=1, limit=4
    $region2: #{feature_aggregate_forward.1} parent=1 // loop_pre_header
      _
    $region3: #{feature_aggregate_forward.1} parent=1 // loop_header
      %s16 = sphi 0, %s20
      %p17 = scmp.ge.s32.totalorder %s16, 4
      %s26 = sphi 0, %s28
      %s29 = sphi 0, %s26
      %s30 = sphi 0, %s29
      %s46 = sphi 0, %s30
      %s50 = sphi 0, %s50
      %s52 = sphi 0, %s50
      %s53 = sphi 0, %s52
      %s67 = sphi 0, %s53
      %s71 = sphi 0, %s71
      %s73 = sphi 0, %s71
      %s74 = sphi 0, %s73
      %s88 = sphi 0, %s74
      %s94 = sphi 0, %s96
      %s97 = sphi 0, %s94
      %s98 = sphi 0, %s97
      %s114 = sphi 0, %s98
      %s118 = sphi 0, %s118
      %s120 = sphi 0, %s118
      %s121 = sphi 0, %s120
      %s135 = sphi 0, %s121
      %s139 = sphi 0, %s139
      %s141 = sphi 0, %s139
      %s142 = sphi 0, %s141
      %s156 = sphi 0, %s142
      %s160 = sphi 0, %s160
      %s162 = sphi 0, %s160
      %s163 = sphi 0, %s162
      %s177 = sphi 0, %s163
      %s181 = sphi 0, %s181
      %s183 = sphi 0, %s181
      %s184 = sphi 0, %s183
      %s198 = sphi 0, %s184
      %s204 = sphi 0, %s206
      %s207 = sphi 0, %s204
      %s208 = sphi 0, %s207
      %s224 = sphi 0, %s208
      %s230 = sphi 0, %s232
      %s233 = sphi 0, %s230
      %s234 = sphi 0, %s233
      %s250 = sphi 0, %s234
    $region4: #{feature_aggregate_forward.1} parent=1 // loop_header_branch
      %19 = sbr.rel (%p17) target = $region8
    $region5: #{feature_aggregate_forward.1} parent=1 // loop_body
      %s21 = ssub.s32 %s16, 1
      %s22 = ssub.s32 %s16, 2
      %s23 = sadd.s32 %s16, 1
      %s24 = ssub.s32 %s16, %s23
      %p25 = scmp.eq.s32.totalorder %s24, 0
      %s27 = sadd.s32 %s26, 1
      %s28 = scalar_select %p25, %s26, %s27
      %p31 = pneg %p25
      %p32 = scmp.eq.s32.totalorder %s16, 1
      %p33 = por %p31, %p32
      %p34 = scmp.ne.s32.totalorder %s26, %s29
      %p35 = scmp.eq.s32.totalorder %s16, 0
      %p36 = por %p34, %p35
      %p37 = scmp.ne.s32.totalorder %s26, %s29
      %p38 = scmp.eq.s32.totalorder %s21, 1
      %p39 = por %p37, %p38
      %p40 = scmp.ne.s32.totalorder %s29, %s30
      %p41 = scmp.eq.s32.totalorder %s21, 0
      %p42 = por %p40, %p41
      %p43 = scmp.ne.s32.totalorder %s29, %s30
      %p44 = scmp.eq.s32.totalorder %s22, 1
      %p45 = por %p43, %p44
      %p47 = scmp.ne.s32.totalorder %s30, %s46
      %p48 = scmp.eq.s32.totalorder %s22, 0
      %p49 = por %p47, %p48
      %s51 = sadd.s32 %s50, 1
      %p54 = scmp.eq.s32.totalorder %s16, 1
      %p55 = scmp.ne.s32.totalorder %s50, %s52
      %p56 = scmp.eq.s32.totalorder %s16, 0
      %p57 = por %p55, %p56
      %p58 = scmp.ne.s32.totalorder %s50, %s52
      %p59 = scmp.eq.s32.totalorder %s21, 1
      %p60 = por %p58, %p59
      %p61 = scmp.ne.s32.totalorder %s52, %s53
      %p62 = scmp.eq.s32.totalorder %s21, 0
      %p63 = por %p61, %p62
      %p64 = scmp.ne.s32.totalorder %s52, %s53
      %p65 = scmp.eq.s32.totalorder %s22, 1
      %p66 = por %p64, %p65
      %p68 = scmp.ne.s32.totalorder %s53, %s67
      %p69 = scmp.eq.s32.totalorder %s22, 0
      %p70 = por %p68, %p69
      %s72 = sadd.s32 %s71, 1
      %p75 = scmp.eq.s32.totalorder %s16, 1
      %p76 = scmp.ne.s32.totalorder %s71, %s73
      %p77 = scmp.eq.s32.totalorder %s16, 0
      %p78 = por %p76, %p77
      %p79 = scmp.ne.s32.totalorder %s71, %s73
      %p80 = scmp.eq.s32.totalorder %s21, 1
      %p81 = por %p79, %p80
      %p82 = scmp.ne.s32.totalorder %s73, %s74
      %p83 = scmp.eq.s32.totalorder %s21, 0
      %p84 = por %p82, %p83
      %p85 = scmp.ne.s32.totalorder %s73, %s74
      %p86 = scmp.eq.s32.totalorder %s22, 1
      %p87 = por %p85, %p86
      %p89 = scmp.ne.s32.totalorder %s74, %s88
      %p90 = scmp.eq.s32.totalorder %s22, 0
      %p91 = por %p89, %p90
      %s92 = ssub.s32 %s16, %s23
      %p93 = scmp.eq.s32.totalorder %s92, 0
      %s95 = sadd.s32 %s94, 1
      %s96 = scalar_select %p93, %s94, %s95
      %p99 = pneg %p93
      %p100 = scmp.eq.s32.totalorder %s16, 1
      %p101 = por %p99, %p100
      %p102 = scmp.ne.s32.totalorder %s94, %s97
      %p103 = scmp.eq.s32.totalorder %s16, 0
      %p104 = por %p102, %p103
      %p105 = scmp.ne.s32.totalorder %s94, %s97
      %p106 = scmp.eq.s32.totalorder %s21, 1
      %p107 = por %p105, %p106
      %p108 = scmp.ne.s32.totalorder %s97, %s98
      %p109 = scmp.eq.s32.totalorder %s21, 0
      %p110 = por %p108, %p109
      %p111 = scmp.ne.s32.totalorder %s97, %s98
      %p112 = scmp.eq.s32.totalorder %s22, 1
      %p113 = por %p111, %p112
      %p115 = scmp.ne.s32.totalorder %s98, %s114
      %p116 = scmp.eq.s32.totalorder %s22, 0
      %p117 = por %p115, %p116
      %s119 = sadd.s32 %s118, 1
      %p122 = scmp.eq.s32.totalorder %s16, 1
      %p123 = scmp.ne.s32.totalorder %s118, %s120
      %p124 = scmp.eq.s32.totalorder %s16, 0
      %p125 = por %p123, %p124
      %p126 = scmp.ne.s32.totalorder %s118, %s120
      %p127 = scmp.eq.s32.totalorder %s21, 1
      %p128 = por %p126, %p127
      %p129 = scmp.ne.s32.totalorder %s120, %s121
      %p130 = scmp.eq.s32.totalorder %s21, 0
      %p131 = por %p129, %p130
      %p132 = scmp.ne.s32.totalorder %s120, %s121
      %p133 = scmp.eq.s32.totalorder %s22, 1
      %p134 = por %p132, %p133
      %p136 = scmp.ne.s32.totalorder %s121, %s135
      %p137 = scmp.eq.s32.totalorder %s22, 0
      %p138 = por %p136, %p137
      %s140 = sadd.s32 %s139, 1
      %p143 = scmp.eq.s32.totalorder %s16, 1
      %p144 = scmp.ne.s32.totalorder %s139, %s141
      %p145 = scmp.eq.s32.totalorder %s16, 0
      %p146 = por %p144, %p145
      %p147 = scmp.ne.s32.totalorder %s139, %s141
      %p148 = scmp.eq.s32.totalorder %s21, 1
      %p149 = por %p147, %p148
      %p150 = scmp.ne.s32.totalorder %s141, %s142
      %p151 = scmp.eq.s32.totalorder %s21, 0
      %p152 = por %p150, %p151
      %p153 = scmp.ne.s32.totalorder %s141, %s142
      %p154 = scmp.eq.s32.totalorder %s22, 1
      %p155 = por %p153, %p154
      %p157 = scmp.ne.s32.totalorder %s142, %s156
      %p158 = scmp.eq.s32.totalorder %s22, 0
      %p159 = por %p157, %p158
      %s161 = sadd.s32 %s160, 1
      %p164 = scmp.eq.s32.totalorder %s16, 1
      %p165 = scmp.ne.s32.totalorder %s160, %s162
      %p166 = scmp.eq.s32.totalorder %s16, 0
      %p167 = por %p165, %p166
      %p168 = scmp.ne.s32.totalorder %s160, %s162
      %p169 = scmp.eq.s32.totalorder %s21, 1
      %p170 = por %p168, %p169
      %p171 = scmp.ne.s32.totalorder %s162, %s163
      %p172 = scmp.eq.s32.totalorder %s21, 0
      %p173 = por %p171, %p172
      %p174 = scmp.ne.s32.totalorder %s162, %s163
      %p175 = scmp.eq.s32.totalorder %s22, 1
      %p176 = por %p174, %p175
      %p178 = scmp.ne.s32.totalorder %s163, %s177
      %p179 = scmp.eq.s32.totalorder %s22, 0
      %p180 = por %p178, %p179
      %s182 = sadd.s32 %s181, 1
      %p185 = scmp.eq.s32.totalorder %s16, 1
      %p186 = scmp.ne.s32.totalorder %s181, %s183
      %p187 = scmp.eq.s32.totalorder %s16, 0
      %p188 = por %p186, %p187
      %p189 = scmp.ne.s32.totalorder %s181, %s183
      %p190 = scmp.eq.s32.totalorder %s21, 1
      %p191 = por %p189, %p190
      %p192 = scmp.ne.s32.totalorder %s183, %s184
      %p193 = scmp.eq.s32.totalorder %s21, 0
      %p194 = por %p192, %p193
      %p195 = scmp.ne.s32.totalorder %s183, %s184
      %p196 = scmp.eq.s32.totalorder %s22, 1
      %p197 = por %p195, %p196
      %p199 = scmp.ne.s32.totalorder %s184, %s198
      %p200 = scmp.eq.s32.totalorder %s22, 0
      %p201 = por %p199, %p200
      %s202 = ssub.s32 %s16, %s23
      %p203 = scmp.eq.s32.totalorder %s202, 0
      %s205 = sadd.s32 %s204, 1
      %s206 = scalar_select %p203, %s204, %s205
      %p209 = pneg %p203
      %p210 = scmp.eq.s32.totalorder %s16, 1
      %p211 = por %p209, %p210
      %p212 = scmp.ne.s32.totalorder %s204, %s207
      %p213 = scmp.eq.s32.totalorder %s16, 0
      %p214 = por %p212, %p213
      %p215 = scmp.ne.s32.totalorder %s204, %s207
      %p216 = scmp.eq.s32.totalorder %s21, 1
      %p217 = por %p215, %p216
      %p218 = scmp.ne.s32.totalorder %s207, %s208
      %p219 = scmp.eq.s32.totalorder %s21, 0
      %p220 = por %p218, %p219
      %p221 = scmp.ne.s32.totalorder %s207, %s208
      %p222 = scmp.eq.s32.totalorder %s22, 1
      %p223 = por %p221, %p222
      %p225 = scmp.ne.s32.totalorder %s208, %s224
      %p226 = scmp.eq.s32.totalorder %s22, 0
      %p227 = por %p225, %p226
      %s228 = ssub.s32 %s16, %s23
      %p229 = scmp.eq.s32.totalorder %s228, 0
      %s231 = sadd.s32 %s230, 1
      %s232 = scalar_select %p229, %s230, %s231
      %p235 = pneg %p229
      %p236 = scmp.eq.s32.totalorder %s16, 1
      %p237 = por %p235, %p236
      %p238 = scmp.ne.s32.totalorder %s230, %s233
      %p239 = scmp.eq.s32.totalorder %s16, 0
      %p240 = por %p238, %p239
      %p241 = scmp.ne.s32.totalorder %s230, %s233
      %p242 = scmp.eq.s32.totalorder %s21, 1
      %p243 = por %p241, %p242
      %p244 = scmp.ne.s32.totalorder %s233, %s234
      %p245 = scmp.eq.s32.totalorder %s21, 0
      %p246 = por %p244, %p245
      %p247 = scmp.ne.s32.totalorder %s233, %s234
      %p248 = scmp.eq.s32.totalorder %s22, 1
      %p249 = por %p247, %p248
      %p251 = scmp.ne.s32.totalorder %s234, %s250
      %p252 = scmp.eq.s32.totalorder %s22, 0
      %p253 = por %p251, %p252
      %p254 = scmp.le.s32.totalorder 1, %s16
      %p255 = scmp.lt.s32.totalorder %s16, 3
      %p256 = pnand %p254, %p255
      %p257 = pneg %p256
      // Predicated region
      $region9: #{feature_aggregate_forward.1} parent=5 // pred_check
        _
      $region10: #{feature_aggregate_forward.1} parent=5 // pred_check_branch
        %259 = sbr.rel (%p256) target = $region12
      $region11: #{feature_aggregate_forward.1} parent=5 // pred_region
        %s260 = ssub.s32 %s16, 1
        // Predicated region
        $region13: #{feature_aggregate_forward.1} parent=11 // pred_check
          %p261 = pneg %p63
        $region14: #{feature_aggregate_forward.1} parent=11 // pred_check_branch
          %263 = sbr.rel (%p261) target = $region16
        $region15: #{feature_aggregate_forward.1} parent=11 // pred_region
          _
        $region16: #{feature_aggregate_forward.1} parent=11 // pred_fallthru
          _
        // Predicated region
        $region17: #{feature_aggregate_forward.1} parent=11 // pred_check
          %p264 = pneg %p84
        $region18: #{feature_aggregate_forward.1} parent=11 // pred_check_branch
          %266 = sbr.rel (%p264) target = $region20
        $region19: #{feature_aggregate_forward.1} parent=11 // pred_region
          _
        $region20: #{feature_aggregate_forward.1} parent=11 // pred_fallthru
          _
        // Predicated region
        $region21: #{feature_aggregate_forward.1} parent=11 // pred_check
          %p267 = pneg %p131
        $region22: #{feature_aggregate_forward.1} parent=11 // pred_check_branch
          %269 = sbr.rel (%p267) target = $region24
        $region23: #{feature_aggregate_forward.1} parent=11 // pred_region
          _
        $region24: #{feature_aggregate_forward.1} parent=11 // pred_fallthru
          _
        // Predicated region
        $region25: #{feature_aggregate_forward.1} parent=11 // pred_check
          %p270 = pneg %p152
        $region26: #{feature_aggregate_forward.1} parent=11 // pred_check_branch
          %272 = sbr.rel (%p270) target = $region28
        $region27: #{feature_aggregate_forward.1} parent=11 // pred_region
          _
        $region28: #{feature_aggregate_forward.1} parent=11 // pred_fallthru
          _
        // Predicated region
        $region29: #{feature_aggregate_forward.1} parent=11 // pred_check
          %p273 = pneg %p173
        $region30: #{feature_aggregate_forward.1} parent=11 // pred_check_branch
          %275 = sbr.rel (%p273) target = $region32
        $region31: #{feature_aggregate_forward.1} parent=11 // pred_region
          _
        $region32: #{feature_aggregate_forward.1} parent=11 // pred_fallthru
          _
        // Predicated region
        $region33: #{feature_aggregate_forward.1} parent=11 // pred_check
          %p276 = pneg %p194
        $region34: #{feature_aggregate_forward.1} parent=11 // pred_check_branch
          %278 = sbr.rel (%p276) target = $region36
        $region35: #{feature_aggregate_forward.1} parent=11 // pred_region
          _
        $region36: #{feature_aggregate_forward.1} parent=11 // pred_fallthru
          _
      $region12: #{feature_aggregate_forward.1} parent=5 // pred_fallthru
        _
      %p279 = scmp.lt.s32.totalorder %s16, 2
      // Predicated region
      $region37: #{feature_aggregate_forward.1} parent=5 // pred_check
        %p280 = pneg %p279
      $region38: #{feature_aggregate_forward.1} parent=5 // pred_check_branch
        %282 = sbr.rel (%p280) target = $region40
      $region39: #{feature_aggregate_forward.1} parent=5 // pred_region
        // Predicated region
        $region41: #{feature_aggregate_forward.1} parent=39 // pred_check
          %p283 = pneg %p36
        $region42: #{feature_aggregate_forward.1} parent=39 // pred_check_branch
          %285 = sbr.rel (%p283) target = $region44
        $region43: #{feature_aggregate_forward.1} parent=39 // pred_region
          %s286 = sand.u32 %s26, 1
          %s287 = sand.u32 %s26, 1
          %s288 = smul.addr %s287, 128
          %s289 = scalar_lea.vmem [#allocation2], %s288
          %s290 = smul.u32 4, %s16
          %s291 = smul.addr %s290, 8
          %s292 = scalar_lea.vmem %s0, %s291
          // Predicated region
          $region45: #{feature_aggregate_forward.1} parent=43 // pred_check
            _
          $region46: #{feature_aggregate_forward.1} parent=43 // pred_check_branch
            %294 = sbr.rel (0) target = $region48
          $region47: #{feature_aggregate_forward.1} parent=43 // pred_region
            // Predicated region
            $region49: #{feature_aggregate_forward.1} parent=47 // pred_check
              _
            $region50: #{feature_aggregate_forward.1} parent=47 // pred_check_branch
              %296 = sbr.rel (0) target = $region52
            $region51: #{feature_aggregate_forward.1} parent=47 // pred_region
              loop: start=0, step=1, limit=1
              $region53: #{feature_aggregate_forward.1} parent=51 // loop_pre_header
                _
              $region54: #{feature_aggregate_forward.1} parent=51 // loop_header
                %s298 = sphi 0, %s302
                %p299 = scmp.ge.s32.totalorder %s298, 1
                %s303 = sphi %s292, %s292
                %s304 = sphi %s289, %s289
              $region55: #{feature_aggregate_forward.1} parent=51 // loop_header_branch
                %301 = sbr.rel (%p299) target = $region59
              $region56: #{feature_aggregate_forward.1} parent=51 // loop_body
                %v305 = vld [vmem:[%s303] sm:$0xff]
                %306 = vst [vmem:[%s304] sm:$0xff] %v305
                %v307 = vld [vmem:[%s303 + $0x8] sm:$0xff]
                %308 = vst [vmem:[%s304 + $0x8] sm:$0xff] %v307
                %v309 = vld [vmem:[%s303 + $0x10] sm:$0xff]
                %310 = vst [vmem:[%s304 + $0x10] sm:$0xff] %v309
                %v311 = vld [vmem:[%s303 + $0x18] sm:$0xff]
                %312 = vst [vmem:[%s304 + $0x18] sm:$0xff] %v311
                %v313 = vld [vmem:[%s303 + $0x40] sm:$0xff]
                %314 = vst [vmem:[%s304 + $0x20] sm:$0xff] %v313
                %v315 = vld [vmem:[%s303 + $0x48] sm:$0xff]
                %316 = vst [vmem:[%s304 + $0x28] sm:$0xff] %v315
                %v317 = vld [vmem:[%s303 + $0x50] sm:$0xff]
                %318 = vst [vmem:[%s304 + $0x30] sm:$0xff] %v317
                %v319 = vld [vmem:[%s303 + $0x58] sm:$0xff]
                %320 = vst [vmem:[%s304 + $0x38] sm:$0xff] %v319
                %v321 = vld [vmem:[%s303 + $0x80] sm:$0xff]
                %322 = vst [vmem:[%s304 + $0x40] sm:$0xff] %v321
                %v323 = vld [vmem:[%s303 + $0x88] sm:$0xff]
                %324 = vst [vmem:[%s304 + $0x48] sm:$0xff] %v323
                %v325 = vld [vmem:[%s303 + $0x90] sm:$0xff]
                %326 = vst [vmem:[%s304 + $0x50] sm:$0xff] %v325
                %v327 = vld [vmem:[%s303 + $0x98] sm:$0xff]
                %328 = vst [vmem:[%s304 + $0x58] sm:$0xff] %v327
                %v329 = vld [vmem:[%s303 + $0xc0] sm:$0xff]
                %330 = vst [vmem:[%s304 + $0x60] sm:$0xff] %v329
                %v331 = vld [vmem:[%s303 + $0xc8] sm:$0xff]
                %332 = vst [vmem:[%s304 + $0x68] sm:$0xff] %v331
                %v333 = vld [vmem:[%s303 + $0xd0] sm:$0xff]
                %334 = vst [vmem:[%s304 + $0x70] sm:$0xff] %v333
                %v335 = vld [vmem:[%s303 + $0xd8] sm:$0xff]
                %336 = vst [vmem:[%s304 + $0x78] sm:$0xff] %v335
              $region57: #{feature_aggregate_forward.1} parent=51 // loop_footer
                %s302 = sadd.s32 1, %s298
              $region58: #{feature_aggregate_forward.1} parent=51 // loop_footer_branch
                %297 = sbr.rel target = $region54
              $region59: #{feature_aggregate_forward.1} parent=51 // loop_exit
                _
            $region52: #{feature_aggregate_forward.1} parent=47 // pred_fallthru
              _
            // Predicated region
            $region60: #{feature_aggregate_forward.1} parent=47 // pred_check
              _
            $region61: #{feature_aggregate_forward.1} parent=47 // pred_check_branch
              %338 = sbr.rel target = $region63
            $region62: #{feature_aggregate_forward.1} parent=47 // pred_region
              _
            $region63: #{feature_aggregate_forward.1} parent=47 // pred_fallthru
              _
          $region48: #{feature_aggregate_forward.1} parent=43 // pred_fallthru
            _
          %339 = vnop
        $region44: #{feature_aggregate_forward.1} parent=39 // pred_fallthru
          _
        // Predicated region
        $region64: #{feature_aggregate_forward.1} parent=39 // pred_check
          %p340 = pneg %p104
        $region65: #{feature_aggregate_forward.1} parent=39 // pred_check_branch
          %342 = sbr.rel (%p340) target = $region67
        $region66: #{feature_aggregate_forward.1} parent=39 // pred_region
          %p343 = scmp.lt.s32.totalorder %s16, 1
          %s344 = scalar_select %p343, %s16, 1
          %s345 = smul.addr %s344, 64
          %s346 = smul.addr %s345, 8
          %s347 = scalar_lea.vmem %s3, %s346
        $region67: #{feature_aggregate_forward.1} parent=39 // pred_fallthru
          _
      $region40: #{feature_aggregate_forward.1} parent=5 // pred_fallthru
        _
      %p348 = scmp.le.s32.totalorder 1, %s16
      %p349 = scmp.lt.s32.totalorder %s16, 3
      %p350 = pnand %p348, %p349
      %p351 = pneg %p350
      // Predicated region
      $region68: #{feature_aggregate_forward.1} parent=5 // pred_check
        _
      $region69: #{feature_aggregate_forward.1} parent=5 // pred_check_branch
        %353 = sbr.rel (%p350) target = $region71
      $region70: #{feature_aggregate_forward.1} parent=5 // pred_region
        %s354 = ssub.s32 %s16, 1
        %s355 = sand.u32 %s29, 1
        %s356 = sand.u32 %s29, 1
        %s357 = smul.addr %s356, 128
        %s358 = scalar_lea.vmem [#allocation2], %s357
        // Predicated region
        $region72: #{feature_aggregate_forward.1} parent=70 // pred_check
          %p359 = pneg %p42
        $region73: #{feature_aggregate_forward.1} parent=70 // pred_check_branch
          %361 = sbr.rel (%p359) target = $region75
        $region74: #{feature_aggregate_forward.1} parent=70 // pred_region
          _
        $region75: #{feature_aggregate_forward.1} parent=70 // pred_fallthru
          _
        %s362 = sand.u32 %s29, 1
        %s363 = sand.u32 %s29, 1
        %s364 = smul.addr %s363, 128
        %s365 = scalar_lea.vmem [#allocation2], %s364
        %p366 = pneg %p42
        %p367 = pneg %p39
        %p368 = pneg %p63
        %p369 = pneg %p60
        %p370 = pneg %p84
        %p371 = pneg %p81
        %p372 = scmp.lt.s32.totalorder %s21, 1
        %s373 = scalar_select %p372, %s21, 1
        %s374 = smul.addr %s373, 64
        %s375 = smul.addr %s374, 8
        %s376 = scalar_lea.vmem %s3, %s375
        %p377 = pneg %p110
        %p378 = pneg %p107
        %p379 = pneg %p131
        %p380 = pneg %p128
        %p381 = pneg %p152
        %p382 = pneg %p149
        %p383 = pneg %p173
        %p384 = pneg %p170
        %p385 = pneg %p194
        %p386 = pneg %p191
        %p387 = pneg %p220
        %p388 = pneg %p217
        %p389 = scmp.lt.s32.totalorder %s21, 1
        %s390 = scalar_select %p389, %s21, 1
        %s391 = smul.addr %s390, 4
        %s392 = smul.addr %s391, 8
        %s393 = scalar_lea.vmem %s8, %s392
        %p394 = pneg %p246
        %p395 = pneg %p243
        %p396 = scmp.lt.s32.totalorder %s21, 1
        %s397 = scalar_select %p396, %s21, 1
        %s398 = smul.addr %s397, 2
        %s399 = scalar_lea.vmem %s9, %s398
        %s400 = smul.u32 4, %s21
        %p401 = scmp.lt.s32.totalorder %s21, 1
        %s402 = scalar_select %p401, %s21, 1
        %s403 = smul.addr %s402, 64
        %s404 = smul.addr %s403, 8
        %s405 = scalar_lea.vmem %s3, %s404
        %p406 = scmp.lt.s32.totalorder %s21, 1
        %s407 = scalar_select %p406, %s21, 1
        %s408 = smul.addr %s407, 4
        %s409 = smul.addr %s408, 8
        %s410 = scalar_lea.vmem %s8, %s409
        %p411 = scmp.lt.s32.totalorder %s21, 1
        %s412 = scalar_select %p411, %s21, 1
        %s413 = smul.addr %s412, 2
        %s414 = scalar_lea.vmem %s9, %s413
        %v415 = vld [vmem:[%s1] sm:$0xff]
        %v416 = vld [vmem:[%s1 + $0x8] sm:$0xff]
        %v417 = vld [vmem:[%s1 + $0x10] sm:$0xff]
        %v418 = vld [vmem:[%s1 + $0x18] sm:$0xff]
        %v419 = vld [vmem:[%s1 + $0x20] sm:$0x1]
        %v420 = vld [vmem:[%s1 + $0x28] sm:$0x1]
        %v421 = vld [vmem:[%s1 + $0x30] sm:$0x1]
        %v422 = vld [vmem:[%s1 + $0x38] sm:$0x1]
        %v423 = vlaneseq
        %v424 = vshrl.u32 %v423, 7
        %v425 = vsub.s32 0, %v424
        %v426 = vrot.slane %v415, %v425
        %v427 = vlaneseq
        %v428 = vshrl.u32 %v427, 7
        %v429 = vsub.s32 0, %v428
        %v430 = vrot.slane %v416, %v429
        %v431 = vlaneseq
        %v432 = vshrl.u32 %v431, 7
        %v433 = vsub.s32 0, %v432
        %v434 = vrot.slane %v417, %v433
        %v435 = vlaneseq
        %v436 = vshrl.u32 %v435, 7
        %v437 = vsub.s32 0, %v436
        %v438 = vrot.slane %v418, %v437
        %v439 = vlaneseq
        %v440 = vshrl.u32 %v439, 7
        %v441 = vsub.s32 1, %v440
        %v442 = vrot.slane %v415, %v441
        %v443 = vlaneseq
        %v444 = vshrl.u32 %v443, 7
        %v445 = vsub.s32 1, %v444
        %v446 = vrot.slane %v416, %v445
        %v447 = vlaneseq
        %v448 = vshrl.u32 %v447, 7
        %v449 = vsub.s32 1, %v448
        %v450 = vrot.slane %v417, %v449
        %v451 = vlaneseq
        %v452 = vshrl.u32 %v451, 7
        %v453 = vsub.s32 1, %v452
        %v454 = vrot.slane %v418, %v453
        %v455 = vlaneseq
        %v456 = vshrl.u32 %v455, 7
        %v457 = vsub.s32 2, %v456
        %v458 = vrot.slane %v415, %v457
        %v459 = vlaneseq
        %v460 = vshrl.u32 %v459, 7
        %v461 = vsub.s32 2, %v460
        %v462 = vrot.slane %v416, %v461
        %v463 = vlaneseq
        %v464 = vshrl.u32 %v463, 7
        %v465 = vsub.s32 2, %v464
        %v466 = vrot.slane %v417, %v465
        %v467 = vlaneseq
        %v468 = vshrl.u32 %v467, 7
        %v469 = vsub.s32 2, %v468
        %v470 = vrot.slane %v418, %v469
        %v471 = vlaneseq
        %v472 = vshrl.u32 %v471, 7
        %v473 = vsub.s32 3, %v472
        %v474 = vrot.slane %v415, %v473
        %v475 = vlaneseq
        %v476 = vshrl.u32 %v475, 7
        %v477 = vsub.s32 3, %v476
        %v478 = vrot.slane %v416, %v477
        %v479 = vlaneseq
        %v480 = vshrl.u32 %v479, 7
        %v481 = vsub.s32 3, %v480
        %v482 = vrot.slane %v417, %v481
        %v483 = vlaneseq
        %v484 = vshrl.u32 %v483, 7
        %v485 = vsub.s32 3, %v484
        %v486 = vrot.slane %v418, %v485
        %v487 = vlaneseq
        %v488 = vshrl.u32 %v487, 7
        %v489 = vsub.s32 4, %v488
        %v490 = vrot.slane %v415, %v489
        %v491 = vlaneseq
        %v492 = vshrl.u32 %v491, 7
        %v493 = vsub.s32 4, %v492
        %v494 = vrot.slane %v416, %v493
        %v495 = vlaneseq
        %v496 = vshrl.u32 %v495, 7
        %v497 = vsub.s32 4, %v496
        %v498 = vrot.slane %v417, %v497
        %v499 = vlaneseq
        %v500 = vshrl.u32 %v499, 7
        %v501 = vsub.s32 4, %v500
        %v502 = vrot.slane %v418, %v501
        %v503 = vlaneseq
        %v504 = vshrl.u32 %v503, 7
        %v505 = vsub.s32 5, %v504
        %v506 = vrot.slane %v415, %v505
        %v507 = vlaneseq
        %v508 = vshrl.u32 %v507, 7
        %v509 = vsub.s32 5, %v508
        %v510 = vrot.slane %v416, %v509
        %v511 = vlaneseq
        %v512 = vshrl.u32 %v511, 7
        %v513 = vsub.s32 5, %v512
        %v514 = vrot.slane %v417, %v513
        %v515 = vlaneseq
        %v516 = vshrl.u32 %v515, 7
        %v517 = vsub.s32 5, %v516
        %v518 = vrot.slane %v418, %v517
        %v519 = vlaneseq
        %v520 = vshrl.u32 %v519, 7
        %v521 = vsub.s32 6, %v520
        %v522 = vrot.slane %v415, %v521
        %v523 = vlaneseq
        %v524 = vshrl.u32 %v523, 7
        %v525 = vsub.s32 6, %v524
        %v526 = vrot.slane %v416, %v525
        %v527 = vlaneseq
        %v528 = vshrl.u32 %v527, 7
        %v529 = vsub.s32 6, %v528
        %v530 = vrot.slane %v417, %v529
        %v531 = vlaneseq
        %v532 = vshrl.u32 %v531, 7
        %v533 = vsub.s32 6, %v532
        %v534 = vrot.slane %v418, %v533
        %v535 = vlaneseq
        %v536 = vshrl.u32 %v535, 7
        %v537 = vsub.s32 7, %v536
        %v538 = vrot.slane %v415, %v537
        %v539 = vlaneseq
        %v540 = vshrl.u32 %v539, 7
        %v541 = vsub.s32 7, %v540
        %v542 = vrot.slane %v416, %v541
        %v543 = vlaneseq
        %v544 = vshrl.u32 %v543, 7
        %v545 = vsub.s32 7, %v544
        %v546 = vrot.slane %v417, %v545
        %v547 = vlaneseq
        %v548 = vshrl.u32 %v547, 7
        %v549 = vsub.s32 7, %v548
        %v550 = vrot.slane %v418, %v549
        %v551 = vlaneseq
        %v552 = vshrl.u32 %v551, 7
        %v553 = vsub.s32 0, %v552
        %v554 = vrot.slane %v419, %v553
        %v555 = vlaneseq
        %v556 = vshrl.u32 %v555, 7
        %v557 = vsub.s32 0, %v556
        %v558 = vrot.slane %v420, %v557
        %v559 = vlaneseq
        %v560 = vshrl.u32 %v559, 7
        %v561 = vsub.s32 0, %v560
        %v562 = vrot.slane %v421, %v561
        %v563 = vlaneseq
        %v564 = vshrl.u32 %v563, 7
        %v565 = vsub.s32 0, %v564
        %v566 = vrot.slane %v422, %v565
        %v567 = vld [vmem:[%s4] sm:$0xff]
        %v568 = vld [vmem:[%s4 + $0x8] sm:$0xff]
        %v569 = vld [vmem:[%s4 + $0x10] sm:$0xff]
        %v570 = vld [vmem:[%s4 + $0x18] sm:$0xff]
        %v571 = vld [vmem:[%s4 + $0x20] sm:$0xff]
        %v572 = vld [vmem:[%s4 + $0x28] sm:$0xff]
        %v573 = vld [vmem:[%s4 + $0x30] sm:$0xff]
        %v574 = vld [vmem:[%s4 + $0x38] sm:$0xff]
        %v575 = vld [vmem:[%s4 + $0x40] sm:$0xff]
        %v576 = vld [vmem:[%s4 + $0x48] sm:$0xff]
        %v577 = vld [vmem:[%s4 + $0x50] sm:$0xff]
        %v578 = vld [vmem:[%s4 + $0x58] sm:$0xff]
        %v579 = vld [vmem:[%s358] sm:$0xff]
        %v580 = vld [vmem:[%s358 + $0x8] sm:$0xff]
        %v581 = vld [vmem:[%s358 + $0x10] sm:$0xff]
        %v582 = vld [vmem:[%s358 + $0x18] sm:$0xff]
        %v583 = vld [vmem:[%s358 + $0x20] sm:$0xff]
        %v584 = vld [vmem:[%s358 + $0x28] sm:$0xff]
        %v585 = vld [vmem:[%s358 + $0x30] sm:$0xff]
        %v586 = vld [vmem:[%s358 + $0x38] sm:$0xff]
        %v587 = vld [vmem:[%s358 + $0x40] sm:$0xff]
        %v588 = vld [vmem:[%s358 + $0x48] sm:$0xff]
        %v589 = vld [vmem:[%s358 + $0x50] sm:$0xff]
        %v590 = vld [vmem:[%s358 + $0x58] sm:$0xff]
        %v591 = vld [vmem:[%s358 + $0x60] sm:$0xff]
        %v592 = vld [vmem:[%s358 + $0x68] sm:$0xff]
        %v593 = vld [vmem:[%s358 + $0x70] sm:$0xff]
        %v594 = vld [vmem:[%s358 + $0x78] sm:$0xff]
        %595 = vrot.lane.b32.xlu0 %v579, 17
        %v596 = vpop.permute.xlu0 %595
        %597 = vrot.lane.b32.xlu0 %v583, 17
        %v598 = vpop.permute.xlu0 %597
        %599 = vrot.lane.b32.xlu0 %v587, 17
        %v600 = vpop.permute.xlu0 %599
        %601 = vrot.lane.b32.xlu0 %v591, 17
        %v602 = vpop.permute.xlu0 %601
        %603 = vrot.lane.b32.xlu0 %v580, 17
        %v604 = vpop.permute.xlu0 %603
        %605 = vrot.lane.b32.xlu0 %v584, 17
        %v606 = vpop.permute.xlu0 %605
        %607 = vrot.lane.b32.xlu0 %v588, 17
        %v608 = vpop.permute.xlu0 %607
        %609 = vrot.lane.b32.xlu0 %v592, 17
        %v610 = vpop.permute.xlu0 %609
        %611 = vrot.lane.b32.xlu0 %v581, 17
        %v612 = vpop.permute.xlu0 %611
        %613 = vrot.lane.b32.xlu0 %v585, 17
        %v614 = vpop.permute.xlu0 %613
        %615 = vrot.lane.b32.xlu0 %v589, 17
        %v616 = vpop.permute.xlu0 %615
        %617 = vrot.lane.b32.xlu0 %v593, 17
        %v618 = vpop.permute.xlu0 %617
        %619 = vrot.lane.b32.xlu0 %v582, 17
        %v620 = vpop.permute.xlu0 %619
        %621 = vrot.lane.b32.xlu0 %v586, 17
        %v622 = vpop.permute.xlu0 %621
        %623 = vrot.lane.b32.xlu0 %v590, 17
        %v624 = vpop.permute.xlu0 %623
        %625 = vrot.lane.b32.xlu0 %v594, 17
        %v626 = vpop.permute.xlu0 %625
        %v627 = vlaneseq
        %v628 = vand.u32 %v627, 127
        %vm629 = vcmp.lt.s32.totalorder %v628, 17
        %v630 = vsel %vm629, %v612, %v620
        %v631 = vsel %vm629, %v614, %v622
        %v632 = vsel %vm629, %v616, %v624
        %v633 = vsel %vm629, %v618, %v626
        %v634 = vsel %vm629, %v604, %v612
        %v635 = vsel %vm629, %v606, %v614
        %v636 = vsel %vm629, %v608, %v616
        %v637 = vsel %vm629, %v610, %v618
        %v638 = vsel %vm629, %v596, %v604
        %v639 = vsel %vm629, %v598, %v606
        %v640 = vsel %vm629, %v600, %v608
        %v641 = vsel %vm629, %v602, %v610
        %v642 = vsel %vm629, %v620, %v596
        %v643 = vsel %vm629, %v622, %v598
        %v644 = vsel %vm629, %v624, %v600
        %v645 = vsel %vm629, %v626, %v602
        %v646 = vmul.f32 %v642, %v426
        %v647 = vmul.f32 %v638, %v430
        %v648 = vmul.f32 %v634, %v434
        %v649 = vmul.f32 %v630, %v438
        %v650 = vmul.f32 %v643, %v426
        %v651 = vmul.f32 %v639, %v430
        %v652 = vmul.f32 %v635, %v434
        %v653 = vmul.f32 %v631, %v438
        %v654 = vmul.f32 %v644, %v426
        %v655 = vmul.f32 %v640, %v430
        %v656 = vmul.f32 %v636, %v434
        %v657 = vmul.f32 %v632, %v438
        %v658 = vmul.f32 %v645, %v426
        %v659 = vmul.f32 %v641, %v430
        %v660 = vmul.f32 %v637, %v434
        %v661 = vmul.f32 %v633, %v438
        %662 = vrot.lane.b32.xlu0 %v579, 16
        %v663 = vpop.permute.xlu0 %662
        %664 = vrot.lane.b32.xlu0 %v583, 16
        %v665 = vpop.permute.xlu0 %664
        %666 = vrot.lane.b32.xlu0 %v587, 16
        %v667 = vpop.permute.xlu0 %666
        %668 = vrot.lane.b32.xlu0 %v591, 16
        %v669 = vpop.permute.xlu0 %668
        %670 = vrot.lane.b32.xlu0 %v580, 16
        %v671 = vpop.permute.xlu0 %670
        %672 = vrot.lane.b32.xlu0 %v584, 16
        %v673 = vpop.permute.xlu0 %672
        %674 = vrot.lane.b32.xlu0 %v588, 16
        %v675 = vpop.permute.xlu0 %674
        %676 = vrot.lane.b32.xlu0 %v592, 16
        %v677 = vpop.permute.xlu0 %676
        %678 = vrot.lane.b32.xlu0 %v581, 16
        %v679 = vpop.permute.xlu0 %678
        %680 = vrot.lane.b32.xlu0 %v585, 16
        %v681 = vpop.permute.xlu0 %680
        %682 = vrot.lane.b32.xlu0 %v589, 16
        %v683 = vpop.permute.xlu0 %682
        %684 = vrot.lane.b32.xlu0 %v593, 16
        %v685 = vpop.permute.xlu0 %684
        %686 = vrot.lane.b32.xlu0 %v582, 16
        %v687 = vpop.permute.xlu0 %686
        %688 = vrot.lane.b32.xlu0 %v586, 16
        %v689 = vpop.permute.xlu0 %688
        %690 = vrot.lane.b32.xlu0 %v590, 16
        %v691 = vpop.permute.xlu0 %690
        %692 = vrot.lane.b32.xlu0 %v594, 16
        %v693 = vpop.permute.xlu0 %692
        %vm694 = vcmp.lt.s32.totalorder %v628, 16
        %v695 = vsel %vm694, %v679, %v687
        %v696 = vsel %vm694, %v681, %v689
        %v697 = vsel %vm694, %v683, %v691
        %v698 = vsel %vm694, %v685, %v693
        %v699 = vsel %vm694, %v671, %v679
        %v700 = vsel %vm694, %v673, %v681
        %v701 = vsel %vm694, %v675, %v683
        %v702 = vsel %vm694, %v677, %v685
        %v703 = vsel %vm694, %v663, %v671
        %v704 = vsel %vm694, %v665, %v673
        %v705 = vsel %vm694, %v667, %v675
        %v706 = vsel %vm694, %v669, %v677
        %v707 = vsel %vm694, %v687, %v663
        %v708 = vsel %vm694, %v689, %v665
        %v709 = vsel %vm694, %v691, %v667
        %v710 = vsel %vm694, %v693, %v669
        %v711 = vmul.f32 %v707, %v442
        %v712 = vmul.f32 %v703, %v446
        %v713 = vmul.f32 %v699, %v450
        %v714 = vmul.f32 %v695, %v454
        %v715 = vmul.f32 %v708, %v442
        %v716 = vmul.f32 %v704, %v446
        %v717 = vmul.f32 %v700, %v450
        %v718 = vmul.f32 %v696, %v454
        %v719 = vmul.f32 %v709, %v442
        %v720 = vmul.f32 %v705, %v446
        %v721 = vmul.f32 %v701, %v450
        %v722 = vmul.f32 %v697, %v454
        %v723 = vmul.f32 %v710, %v442
        %v724 = vmul.f32 %v706, %v446
        %v725 = vmul.f32 %v702, %v450
        %v726 = vmul.f32 %v698, %v454
        %727 = vrot.lane.b32.xlu0 %v579, 15
        %v728 = vpop.permute.xlu0 %727
        %729 = vrot.lane.b32.xlu0 %v583, 15
        %v730 = vpop.permute.xlu0 %729
        %731 = vrot.lane.b32.xlu0 %v587, 15
        %v732 = vpop.permute.xlu0 %731
        %733 = vrot.lane.b32.xlu0 %v591, 15
        %v734 = vpop.permute.xlu0 %733
        %735 = vrot.lane.b32.xlu0 %v580, 15
        %v736 = vpop.permute.xlu0 %735
        %737 = vrot.lane.b32.xlu0 %v584, 15
        %v738 = vpop.permute.xlu0 %737
        %739 = vrot.lane.b32.xlu0 %v588, 15
        %v740 = vpop.permute.xlu0 %739
        %741 = vrot.lane.b32.xlu0 %v592, 15
        %v742 = vpop.permute.xlu0 %741
        %743 = vrot.lane.b32.xlu0 %v581, 15
        %v744 = vpop.permute.xlu0 %743
        %745 = vrot.lane.b32.xlu0 %v585, 15
        %v746 = vpop.permute.xlu0 %745
        %747 = vrot.lane.b32.xlu0 %v589, 15
        %v748 = vpop.permute.xlu0 %747
        %749 = vrot.lane.b32.xlu0 %v593, 15
        %v750 = vpop.permute.xlu0 %749
        %751 = vrot.lane.b32.xlu0 %v582, 15
        %v752 = vpop.permute.xlu0 %751
        %753 = vrot.lane.b32.xlu0 %v586, 15
        %v754 = vpop.permute.xlu0 %753
        %755 = vrot.lane.b32.xlu0 %v590, 15
        %v756 = vpop.permute.xlu0 %755
        %757 = vrot.lane.b32.xlu0 %v594, 15
        %v758 = vpop.permute.xlu0 %757
        %vm759 = vcmp.lt.s32.totalorder %v628, 15
        %v760 = vsel %vm759, %v744, %v752
        %v761 = vsel %vm759, %v746, %v754
        %v762 = vsel %vm759, %v748, %v756
        %v763 = vsel %vm759, %v750, %v758
        %v764 = vsel %vm759, %v736, %v744
        %v765 = vsel %vm759, %v738, %v746
        %v766 = vsel %vm759, %v740, %v748
        %v767 = vsel %vm759, %v742, %v750
        %v768 = vsel %vm759, %v728, %v736
        %v769 = vsel %vm759, %v730, %v738
        %v770 = vsel %vm759, %v732, %v740
        %v771 = vsel %vm759, %v734, %v742
        %v772 = vsel %vm759, %v752, %v728
        %v773 = vsel %vm759, %v754, %v730
        %v774 = vsel %vm759, %v756, %v732
        %v775 = vsel %vm759, %v758, %v734
        %v776 = vmul.f32 %v772, %v458
        %v777 = vmul.f32 %v768, %v462
        %v778 = vmul.f32 %v764, %v466
        %v779 = vmul.f32 %v760, %v470
        %v780 = vmul.f32 %v773, %v458
        %v781 = vmul.f32 %v769, %v462
        %v782 = vmul.f32 %v765, %v466
        %v783 = vmul.f32 %v761, %v470
        %v784 = vmul.f32 %v774, %v458
        %v785 = vmul.f32 %v770, %v462
        %v786 = vmul.f32 %v766, %v466
        %v787 = vmul.f32 %v762, %v470
        %v788 = vmul.f32 %v775, %v458
        %v789 = vmul.f32 %v771, %v462
        %v790 = vmul.f32 %v767, %v466
        %v791 = vmul.f32 %v763, %v470
        %792 = vrot.lane.b32.xlu0 %v579, 1
        %v793 = vpop.permute.xlu0 %792
        %794 = vrot.lane.b32.xlu0 %v583, 1
        %v795 = vpop.permute.xlu0 %794
        %796 = vrot.lane.b32.xlu0 %v587, 1
        %v797 = vpop.permute.xlu0 %796
        %798 = vrot.lane.b32.xlu0 %v591, 1
        %v799 = vpop.permute.xlu0 %798
        %800 = vrot.lane.b32.xlu0 %v580, 1
        %v801 = vpop.permute.xlu0 %800
        %802 = vrot.lane.b32.xlu0 %v584, 1
        %v803 = vpop.permute.xlu0 %802
        %804 = vrot.lane.b32.xlu0 %v588, 1
        %v805 = vpop.permute.xlu0 %804
        %806 = vrot.lane.b32.xlu0 %v592, 1
        %v807 = vpop.permute.xlu0 %806
        %808 = vrot.lane.b32.xlu0 %v581, 1
        %v809 = vpop.permute.xlu0 %808
        %810 = vrot.lane.b32.xlu0 %v585, 1
        %v811 = vpop.permute.xlu0 %810
        %812 = vrot.lane.b32.xlu0 %v589, 1
        %v813 = vpop.permute.xlu0 %812
        %814 = vrot.lane.b32.xlu0 %v593, 1
        %v815 = vpop.permute.xlu0 %814
        %816 = vrot.lane.b32.xlu0 %v582, 1
        %v817 = vpop.permute.xlu0 %816
        %818 = vrot.lane.b32.xlu0 %v586, 1
        %v819 = vpop.permute.xlu0 %818
        %820 = vrot.lane.b32.xlu0 %v590, 1
        %v821 = vpop.permute.xlu0 %820
        %822 = vrot.lane.b32.xlu0 %v594, 1
        %v823 = vpop.permute.xlu0 %822
        %vm824 = vcmp.lt.s32.totalorder %v628, 1
        %v825 = vsel %vm824, %v809, %v817
        %v826 = vsel %vm824, %v811, %v819
        %v827 = vsel %vm824, %v813, %v821
        %v828 = vsel %vm824, %v815, %v823
        %v829 = vsel %vm824, %v801, %v809
        %v830 = vsel %vm824, %v803, %v811
        %v831 = vsel %vm824, %v805, %v813
        %v832 = vsel %vm824, %v807, %v815
        %v833 = vsel %vm824, %v793, %v801
        %v834 = vsel %vm824, %v795, %v803
        %v835 = vsel %vm824, %v797, %v805
        %v836 = vsel %vm824, %v799, %v807
        %v837 = vsel %vm824, %v817, %v793
        %v838 = vsel %vm824, %v819, %v795
        %v839 = vsel %vm824, %v821, %v797
        %v840 = vsel %vm824, %v823, %v799
        %v841 = vmul.f32 %v837, %v474
        %v842 = vmul.f32 %v833, %v478
        %v843 = vmul.f32 %v829, %v482
        %v844 = vmul.f32 %v825, %v486
        %v845 = vmul.f32 %v838, %v474
        %v846 = vmul.f32 %v834, %v478
        %v847 = vmul.f32 %v830, %v482
        %v848 = vmul.f32 %v826, %v486
        %v849 = vmul.f32 %v839, %v474
        %v850 = vmul.f32 %v835, %v478
        %v851 = vmul.f32 %v831, %v482
        %v852 = vmul.f32 %v827, %v486
        %v853 = vmul.f32 %v840, %v474
        %v854 = vmul.f32 %v836, %v478
        %v855 = vmul.f32 %v832, %v482
        %v856 = vmul.f32 %v828, %v486
        %v857 = vmul.f32 %v579, %v490
        %v858 = vmul.f32 %v580, %v494
        %v859 = vmul.f32 %v581, %v498
        %v860 = vmul.f32 %v582, %v502
        %v861 = vmul.f32 %v583, %v490
        %v862 = vmul.f32 %v584, %v494
        %v863 = vmul.f32 %v585, %v498
        %v864 = vmul.f32 %v586, %v502
        %v865 = vmul.f32 %v587, %v490
        %v866 = vmul.f32 %v588, %v494
        %v867 = vmul.f32 %v589, %v498
        %v868 = vmul.f32 %v590, %v502
        %v869 = vmul.f32 %v591, %v490
        %v870 = vmul.f32 %v592, %v494
        %v871 = vmul.f32 %v593, %v498
        %v872 = vmul.f32 %v594, %v502
        %873 = vrot.lane.b32.xlu0 %v579, 127
        %v874 = vpop.permute.xlu0 %873
        %875 = vrot.lane.b32.xlu0 %v583, 127
        %v876 = vpop.permute.xlu0 %875
        %877 = vrot.lane.b32.xlu0 %v587, 127
        %v878 = vpop.permute.xlu0 %877
        %879 = vrot.lane.b32.xlu0 %v591, 127
        %v880 = vpop.permute.xlu0 %879
        %881 = vrot.lane.b32.xlu0 %v580, 127
        %v882 = vpop.permute.xlu0 %881
        %883 = vrot.lane.b32.xlu0 %v584, 127
        %v884 = vpop.permute.xlu0 %883
        %885 = vrot.lane.b32.xlu0 %v588, 127
        %v886 = vpop.permute.xlu0 %885
        %887 = vrot.lane.b32.xlu0 %v592, 127
        %v888 = vpop.permute.xlu0 %887
        %889 = vrot.lane.b32.xlu0 %v581, 127
        %v890 = vpop.permute.xlu0 %889
        %891 = vrot.lane.b32.xlu0 %v585, 127
        %v892 = vpop.permute.xlu0 %891
        %893 = vrot.lane.b32.xlu0 %v589, 127
        %v894 = vpop.permute.xlu0 %893
        %895 = vrot.lane.b32.xlu0 %v593, 127
        %v896 = vpop.permute.xlu0 %895
        %897 = vrot.lane.b32.xlu0 %v582, 127
        %v898 = vpop.permute.xlu0 %897
        %899 = vrot.lane.b32.xlu0 %v586, 127
        %v900 = vpop.permute.xlu0 %899
        %901 = vrot.lane.b32.xlu0 %v590, 127
        %v902 = vpop.permute.xlu0 %901
        %903 = vrot.lane.b32.xlu0 %v594, 127
        %v904 = vpop.permute.xlu0 %903
        %vm905 = vcmp.lt.s32.totalorder %v628, 127
        %v906 = vsel %vm905, %v890, %v898
        %v907 = vsel %vm905, %v892, %v900
        %v908 = vsel %vm905, %v894, %v902
        %v909 = vsel %vm905, %v896, %v904
        %v910 = vsel %vm905, %v882, %v890
        %v911 = vsel %vm905, %v884, %v892
        %v912 = vsel %vm905, %v886, %v894
        %v913 = vsel %vm905, %v888, %v896
        %v914 = vsel %vm905, %v874, %v882
        %v915 = vsel %vm905, %v876, %v884
        %v916 = vsel %vm905, %v878, %v886
        %v917 = vsel %vm905, %v880, %v888
        %v918 = vsel %vm905, %v898, %v874
        %v919 = vsel %vm905, %v900, %v876
        %v920 = vsel %vm905, %v902, %v878
        %v921 = vsel %vm905, %v904, %v880
        %v922 = vmul.f32 %v914, %v506
        %v923 = vmul.f32 %v910, %v510
        %v924 = vmul.f32 %v906, %v514
        %v925 = vmul.f32 %v918, %v518
        %v926 = vmul.f32 %v915, %v506
        %v927 = vmul.f32 %v911, %v510
        %v928 = vmul.f32 %v907, %v514
        %v929 = vmul.f32 %v919, %v518
        %v930 = vmul.f32 %v916, %v506
        %v931 = vmul.f32 %v912, %v510
        %v932 = vmul.f32 %v908, %v514
        %v933 = vmul.f32 %v920, %v518
        %v934 = vmul.f32 %v917, %v506
        %v935 = vmul.f32 %v913, %v510
        %v936 = vmul.f32 %v909, %v514
        %v937 = vmul.f32 %v921, %v518
        %938 = vrot.lane.b32.xlu0 %v579, 113
        %v939 = vpop.permute.xlu0 %938
        %940 = vrot.lane.b32.xlu0 %v583, 113
        %v941 = vpop.permute.xlu0 %940
        %942 = vrot.lane.b32.xlu0 %v587, 113
        %v943 = vpop.permute.xlu0 %942
        %944 = vrot.lane.b32.xlu0 %v591, 113
        %v945 = vpop.permute.xlu0 %944
        %946 = vrot.lane.b32.xlu0 %v580, 113
        %v947 = vpop.permute.xlu0 %946
        %948 = vrot.lane.b32.xlu0 %v584, 113
        %v949 = vpop.permute.xlu0 %948
        %950 = vrot.lane.b32.xlu0 %v588, 113
        %v951 = vpop.permute.xlu0 %950
        %952 = vrot.lane.b32.xlu0 %v592, 113
        %v953 = vpop.permute.xlu0 %952
        %954 = vrot.lane.b32.xlu0 %v581, 113
        %v955 = vpop.permute.xlu0 %954
        %956 = vrot.lane.b32.xlu0 %v585, 113
        %v957 = vpop.permute.xlu0 %956
        %958 = vrot.lane.b32.xlu0 %v589, 113
        %v959 = vpop.permute.xlu0 %958
        %960 = vrot.lane.b32.xlu0 %v593, 113
        %v961 = vpop.permute.xlu0 %960
        %962 = vrot.lane.b32.xlu0 %v582, 113
        %v963 = vpop.permute.xlu0 %962
        %964 = vrot.lane.b32.xlu0 %v586, 113
        %v965 = vpop.permute.xlu0 %964
        %966 = vrot.lane.b32.xlu0 %v590, 113
        %v967 = vpop.permute.xlu0 %966
        %968 = vrot.lane.b32.xlu0 %v594, 113
        %v969 = vpop.permute.xlu0 %968
        %vm970 = vcmp.lt.s32.totalorder %v628, 113
        %v971 = vsel %vm970, %v955, %v963
        %v972 = vsel %vm970, %v957, %v965
        %v973 = vsel %vm970, %v959, %v967
        %v974 = vsel %vm970, %v961, %v969
        %v975 = vsel %vm970, %v947, %v955
        %v976 = vsel %vm970, %v949, %v957
        %v977 = vsel %vm970, %v951, %v959
        %v978 = vsel %vm970, %v953, %v961
        %v979 = vsel %vm970, %v939, %v947
        %v980 = vsel %vm970, %v941, %v949
        %v981 = vsel %vm970, %v943, %v951
        %v982 = vsel %vm970, %v945, %v953
        %v983 = vsel %vm970, %v963, %v939
        %v984 = vsel %vm970, %v965, %v941
        %v985 = vsel %vm970, %v967, %v943
        %v986 = vsel %vm970, %v969, %v945
        %v987 = vmul.f32 %v979, %v522
        %v988 = vmul.f32 %v975, %v526
        %v989 = vmul.f32 %v971, %v530
        %v990 = vmul.f32 %v983, %v534
        %v991 = vmul.f32 %v980, %v522
        %v992 = vmul.f32 %v976, %v526
        %v993 = vmul.f32 %v972, %v530
        %v994 = vmul.f32 %v984, %v534
        %v995 = vmul.f32 %v981, %v522
        %v996 = vmul.f32 %v977, %v526
        %v997 = vmul.f32 %v973, %v530
        %v998 = vmul.f32 %v985, %v534
        %v999 = vmul.f32 %v982, %v522
        %v1000 = vmul.f32 %v978, %v526
        %v1001 = vmul.f32 %v974, %v530
        %v1002 = vmul.f32 %v986, %v534
        %1003 = vrot.lane.b32.xlu0 %v579, 112
        %v1004 = vpop.permute.xlu0 %1003
        %1005 = vrot.lane.b32.xlu0 %v583, 112
        %v1006 = vpop.permute.xlu0 %1005
        %1007 = vrot.lane.b32.xlu0 %v587, 112
        %v1008 = vpop.permute.xlu0 %1007
        %1009 = vrot.lane.b32.xlu0 %v591, 112
        %v1010 = vpop.permute.xlu0 %1009
        %1011 = vrot.lane.b32.xlu0 %v580, 112
        %v1012 = vpop.permute.xlu0 %1011
        %1013 = vrot.lane.b32.xlu0 %v584, 112
        %v1014 = vpop.permute.xlu0 %1013
        %1015 = vrot.lane.b32.xlu0 %v588, 112
        %v1016 = vpop.permute.xlu0 %1015
        %1017 = vrot.lane.b32.xlu0 %v592, 112
        %v1018 = vpop.permute.xlu0 %1017
        %1019 = vrot.lane.b32.xlu0 %v581, 112
        %v1020 = vpop.permute.xlu0 %1019
        %1021 = vrot.lane.b32.xlu0 %v585, 112
        %v1022 = vpop.permute.xlu0 %1021
        %1023 = vrot.lane.b32.xlu0 %v589, 112
        %v1024 = vpop.permute.xlu0 %1023
        %1025 = vrot.lane.b32.xlu0 %v593, 112
        %v1026 = vpop.permute.xlu0 %1025
        %1027 = vrot.lane.b32.xlu0 %v582, 112
        %v1028 = vpop.permute.xlu0 %1027
        %1029 = vrot.lane.b32.xlu0 %v586, 112
        %v1030 = vpop.permute.xlu0 %1029
        %1031 = vrot.lane.b32.xlu0 %v590, 112
        %v1032 = vpop.permute.xlu0 %1031
        %1033 = vrot.lane.b32.xlu0 %v594, 112
        %v1034 = vpop.permute.xlu0 %1033
        %vm1035 = vcmp.lt.s32.totalorder %v628, 112
        %v1036 = vsel %vm1035, %v1020, %v1028
        %v1037 = vsel %vm1035, %v1022, %v1030
        %v1038 = vsel %vm1035, %v1024, %v1032
        %v1039 = vsel %vm1035, %v1026, %v1034
        %v1040 = vsel %vm1035, %v1012, %v1020
        %v1041 = vsel %vm1035, %v1014, %v1022
        %v1042 = vsel %vm1035, %v1016, %v1024
        %v1043 = vsel %vm1035, %v1018, %v1026
        %v1044 = vsel %vm1035, %v1004, %v1012
        %v1045 = vsel %vm1035, %v1006, %v1014
        %v1046 = vsel %vm1035, %v1008, %v1016
        %v1047 = vsel %vm1035, %v1010, %v1018
        %v1048 = vsel %vm1035, %v1028, %v1004
        %v1049 = vsel %vm1035, %v1030, %v1006
        %v1050 = vsel %vm1035, %v1032, %v1008
        %v1051 = vsel %vm1035, %v1034, %v1010
        %v1052 = vmul.f32 %v1044, %v538
        %v1053 = vmul.f32 %v1040, %v542
        %v1054 = vmul.f32 %v1036, %v546
        %v1055 = vmul.f32 %v1048, %v550
        %v1056 = vmul.f32 %v1045, %v538
        %v1057 = vmul.f32 %v1041, %v542
        %v1058 = vmul.f32 %v1037, %v546
        %v1059 = vmul.f32 %v1049, %v550
        %v1060 = vmul.f32 %v1046, %v538
        %v1061 = vmul.f32 %v1042, %v542
        %v1062 = vmul.f32 %v1038, %v546
        %v1063 = vmul.f32 %v1050, %v550
        %v1064 = vmul.f32 %v1047, %v538
        %v1065 = vmul.f32 %v1043, %v542
        %v1066 = vmul.f32 %v1039, %v546
        %v1067 = vmul.f32 %v1051, %v550
        %1068 = vrot.lane.b32.xlu0 %v579, 111
        %v1069 = vpop.permute.xlu0 %1068
        %1070 = vrot.lane.b32.xlu0 %v583, 111
        %v1071 = vpop.permute.xlu0 %1070
        %1072 = vrot.lane.b32.xlu0 %v587, 111
        %v1073 = vpop.permute.xlu0 %1072
        %1074 = vrot.lane.b32.xlu0 %v591, 111
        %v1075 = vpop.permute.xlu0 %1074
        %1076 = vrot.lane.b32.xlu0 %v580, 111
        %v1077 = vpop.permute.xlu0 %1076
        %1078 = vrot.lane.b32.xlu0 %v584, 111
        %v1079 = vpop.permute.xlu0 %1078
        %1080 = vrot.lane.b32.xlu0 %v588, 111
        %v1081 = vpop.permute.xlu0 %1080
        %1082 = vrot.lane.b32.xlu0 %v592, 111
        %v1083 = vpop.permute.xlu0 %1082
        %1084 = vrot.lane.b32.xlu0 %v581, 111
        %v1085 = vpop.permute.xlu0 %1084
        %1086 = vrot.lane.b32.xlu0 %v585, 111
        %v1087 = vpop.permute.xlu0 %1086
        %1088 = vrot.lane.b32.xlu0 %v589, 111
        %v1089 = vpop.permute.xlu0 %1088
        %1090 = vrot.lane.b32.xlu0 %v593, 111
        %v1091 = vpop.permute.xlu0 %1090
        %1092 = vrot.lane.b32.xlu0 %v582, 111
        %v1093 = vpop.permute.xlu0 %1092
        %1094 = vrot.lane.b32.xlu0 %v586, 111
        %v1095 = vpop.permute.xlu0 %1094
        %1096 = vrot.lane.b32.xlu0 %v590, 111
        %v1097 = vpop.permute.xlu0 %1096
        %1098 = vrot.lane.b32.xlu0 %v594, 111
        %v1099 = vpop.permute.xlu0 %1098
        %vm1100 = vcmp.lt.s32.totalorder %v628, 111
        %v1101 = vsel %vm1100, %v1085, %v1093
        %v1102 = vsel %vm1100, %v1087, %v1095
        %v1103 = vsel %vm1100, %v1089, %v1097
        %v1104 = vsel %vm1100, %v1091, %v1099
        %v1105 = vsel %vm1100, %v1077, %v1085
        %v1106 = vsel %vm1100, %v1079, %v1087
        %v1107 = vsel %vm1100, %v1081, %v1089
        %v1108 = vsel %vm1100, %v1083, %v1091
        %v1109 = vsel %vm1100, %v1069, %v1077
        %v1110 = vsel %vm1100, %v1071, %v1079
        %v1111 = vsel %vm1100, %v1073, %v1081
        %v1112 = vsel %vm1100, %v1075, %v1083
        %v1113 = vsel %vm1100, %v1093, %v1069
        %v1114 = vsel %vm1100, %v1095, %v1071
        %v1115 = vsel %vm1100, %v1097, %v1073
        %v1116 = vsel %vm1100, %v1099, %v1075
        %v1117 = vmul.f32 %v1109, %v554
        %v1118 = vmul.f32 %v1105, %v558
        %v1119 = vmul.f32 %v1101, %v562
        %v1120 = vmul.f32 %v1113, %v566
        %v1121 = vmul.f32 %v1110, %v554
        %v1122 = vmul.f32 %v1106, %v558
        %v1123 = vmul.f32 %v1102, %v562
        %v1124 = vmul.f32 %v1114, %v566
        %v1125 = vmul.f32 %v1111, %v554
        %v1126 = vmul.f32 %v1107, %v558
        %v1127 = vmul.f32 %v1103, %v562
        %v1128 = vmul.f32 %v1115, %v566
        %v1129 = vmul.f32 %v1112, %v554
        %v1130 = vmul.f32 %v1108, %v558
        %v1131 = vmul.f32 %v1104, %v562
        %v1132 = vmul.f32 %v1116, %v566
        %v1133 = vld [vmem:[%s5] sm:$0xff]
        %v1134 = vld [vmem:[%s5 + $0x8] sm:$0xff]
        %v1135 = vld [vmem:[%s5 + $0x10] sm:$0xff]
        %v1136 = vld [vmem:[%s5 + $0x18] sm:$0xff]
        %1138 = vset.pattern.permute.xlu0 0
        %1139 = vperm.xlu0 %1138, %v1133
        %v1140 = vpop.permute.xlu0 %1139
        %1143 = vset.pattern.permute.xlu0 0
        %1144 = vperm.xlu0 %1143, %v1134
        %v1145 = vpop.permute.xlu0 %1144
        %1148 = vset.pattern.permute.xlu0 0
        %1149 = vperm.xlu0 %1148, %v1135
        %v1150 = vpop.permute.xlu0 %1149
        %1153 = vset.pattern.permute.xlu0 0
        %1154 = vperm.xlu0 %1153, %v1136
        %v1155 = vpop.permute.xlu0 %1154
        %vm1157 = vcmask 261120
        %v1159 = vsel %vm1157, %v569, 0
        %v1162 = vsel %vm1157, %v572, 0
        %v1165 = vsel %vm1157, %v575, 0
        %v1168 = vsel %vm1157, %v578, 0
        %1170 = vmatprep.subr.mxu0 %v854
        %1171 = vmatpush1.msra.mxu0 %v853
        %1172 = vmatprep.subr.mxu0 %v850
        %1173 = vmatpush1.msra.mxu0 %v849
        %1174 = vmatprep.subr.mxu0 %v846
        %1175 = vmatpush1.msra.mxu0 %v845
        %1176 = vmatprep.subr.mxu0 %v842
        %1177 = vmatpush1.msra.mxu0 %v841
        %1178 = vmatprep.subr.mxu0 %v789
        %1179 = vmatpush1.msra.mxu0 %v788
        %1180 = vmatprep.subr.mxu0 %v785
        %1181 = vmatpush1.msra.mxu0 %v784
        %1182 = vmatprep.subr.mxu0 %v781
        %1183 = vmatpush1.msra.mxu0 %v780
        %1184 = vmatprep.subr.mxu0 %v777
        %1185 = vmatpush1.msra.mxu0 %v776
        %1186 = vmatprep.subr.mxu0 %v724
        %1187 = vmatpush1.msra.mxu0 %v723
        %1188 = vmatprep.subr.mxu0 %v720
        %1189 = vmatpush1.msra.mxu0 %v719
        %1190 = vmatprep.subr.mxu0 %v716
        %1191 = vmatpush1.msra.mxu0 %v715
        %1192 = vmatprep.subr.mxu0 %v712
        %1193 = vmatpush1.msra.mxu0 %v711
        %1194 = vmatprep.subr.mxu0 %v659
        %1195 = vmatpush1.msra.mxu0 %v658
        %1196 = vmatprep.subr.mxu0 %v655
        %1197 = vmatpush1.msra.mxu0 %v654
        %1198 = vmatprep.subr.mxu0 %v651
        %1199 = vmatpush1.msra.mxu0 %v650
        %1200 = vmatprep.subr.mxu0 %v647
        %1201 = vmatpush1.msra.mxu0 %v646
        %1202 = vmatprep.subr.mxu0 %v1065
        %1203 = vmatpush2.msra.mxu0 %v1064
        %1204 = vmatprep.subr.mxu0 %v1061
        %1205 = vmatpush2.msra.mxu0 %v1060
        %1206 = vmatprep.subr.mxu0 %v1057
        %1207 = vmatpush2.msra.mxu0 %v1056
        %1208 = vmatprep.subr.mxu0 %v1053
        %1209 = vmatpush2.msra.mxu0 %v1052
        %1210 = vmatprep.subr.mxu0 %v1000
        %1211 = vmatpush2.msra.mxu0 %v999
        %1212 = vmatprep.subr.mxu0 %v996
        %1213 = vmatpush2.msra.mxu0 %v995
        %1214 = vmatprep.subr.mxu0 %v992
        %1215 = vmatpush2.msra.mxu0 %v991
        %1216 = vmatprep.subr.mxu0 %v988
        %1217 = vmatpush2.msra.mxu0 %v987
        %1218 = vmatprep.subr.mxu0 %v935
        %1219 = vmatpush2.msra.mxu0 %v934
        %1220 = vmatprep.subr.mxu0 %v931
        %1221 = vmatpush2.msra.mxu0 %v930
        %1222 = vmatprep.subr.mxu0 %v927
        %1223 = vmatpush2.msra.mxu0 %v926
        %1224 = vmatprep.subr.mxu0 %v923
        %1225 = vmatpush2.msra.mxu0 %v922
        %1226 = vmatprep.subr.mxu0 %v870
        %1227 = vmatpush2.msra.mxu0 %v869
        %1228 = vmatprep.subr.mxu0 %v866
        %1229 = vmatpush2.msra.mxu0 %v865
        %1230 = vmatprep.subr.mxu0 %v862
        %1231 = vmatpush2.msra.mxu0 %v861
        %1232 = vmatprep.subr.mxu0 %v858
        %1233 = vmatpush2.msra.mxu0 %v857
        %1234 = vmatprep.mubr.f32.mxu0 %v568
        %1235 = vmatmul.mubr.f32.gmra.mxu0 %v567
        %v1236 = vpop.f32.mrf.mxu0
        %v1237 = vadd.f32 %v1140, %v1236
        %v1238 = vpop.f32.mrf.mxu0
        %v1239 = vadd.f32 %v1140, %v1238
        %1240 = vmatprep.mubr.f32.mxu0 %v571
        %1241 = vmatmul.mubr.f32.gmra.mxu0 %v570
        %v1242 = vpop.f32.mrf.mxu0
        %v1243 = vadd.f32 %v1145, %v1242
        %v1244 = vpop.f32.mrf.mxu0
        %v1245 = vadd.f32 %v1145, %v1244
        %1246 = vmatprep.mubr.f32.mxu0 %v574
        %1247 = vmatmul.mubr.f32.gmra.mxu0 %v573
        %v1248 = vpop.f32.mrf.mxu0
        %v1249 = vadd.f32 %v1150, %v1248
        %v1250 = vpop.f32.mrf.mxu0
        %v1251 = vadd.f32 %v1150, %v1250
        %1252 = vmatprep.mubr.f32.mxu0 %v577
        %1253 = vmatmul.mubr.f32.gmra.mxu0 %v576
        %v1254 = vpop.f32.mrf.mxu0
        %v1255 = vadd.f32 %v1155, %v1254
        %v1256 = vpop.f32.mrf.mxu0
        %v1257 = vadd.f32 %v1155, %v1256
        %1258 = vdwg.mxu0
        %1259 = vmatprep.subr.mxu0 0.0
        %1260 = vmatpush1.msra.mxu0 0.0
        %1261 = vmatprep.subr.mxu0 0.0
        %1262 = vmatpush1.msra.mxu0 0.0
        %1263 = vmatprep.subr.mxu0 0.0
        %1264 = vmatpush1.msra.mxu0 0.0
        %1265 = vmatprep.subr.mxu0 0.0
        %1266 = vmatpush1.msra.mxu0 0.0
        %1267 = vmatprep.subr.mxu0 0.0
        %1268 = vmatpush1.msra.mxu0 0.0
        %1269 = vmatprep.subr.mxu0 0.0
        %1270 = vmatpush1.msra.mxu0 0.0
        %1271 = vmatprep.subr.mxu0 0.0
        %1272 = vmatpush1.msra.mxu0 0.0
        %1273 = vmatprep.subr.mxu0 0.0
        %1274 = vmatpush1.msra.mxu0 0.0
        %1275 = vmatprep.subr.mxu0 0.0
        %1276 = vmatpush1.msra.mxu0 0.0
        %1277 = vmatprep.subr.mxu0 0.0
        %1278 = vmatpush1.msra.mxu0 0.0
        %1279 = vmatprep.subr.mxu0 0.0
        %1280 = vmatpush1.msra.mxu0 0.0
        %1281 = vmatprep.subr.mxu0 0.0
        %1282 = vmatpush1.msra.mxu0 0.0
        %1283 = vmatprep.subr.mxu0 %v1130
        %1284 = vmatpush1.msra.mxu0 %v1129
        %1285 = vmatprep.subr.mxu0 %v1126
        %1286 = vmatpush1.msra.mxu0 %v1125
        %1287 = vmatprep.subr.mxu0 %v1122
        %1288 = vmatpush1.msra.mxu0 %v1121
        %1289 = vmatprep.subr.mxu0 %v1118
        %1290 = vmatpush1.msra.mxu0 %v1117
        %1291 = vmatprep.subr.mxu0 0.0
        %1292 = vmatpush2.msra.mxu0 0.0
        %1293 = vmatprep.subr.mxu0 0.0
        %1294 = vmatpush2.msra.mxu0 0.0
        %1295 = vmatprep.subr.mxu0 0.0
        %1296 = vmatpush2.msra.mxu0 0.0
        %1297 = vmatprep.subr.mxu0 0.0
        %1298 = vmatpush2.msra.mxu0 0.0
        %1299 = vmatprep.subr.mxu0 0.0
        %1300 = vmatpush2.msra.mxu0 0.0
        %1301 = vmatprep.subr.mxu0 0.0
        %1302 = vmatpush2.msra.mxu0 0.0
        %1303 = vmatprep.subr.mxu0 0.0
        %1304 = vmatpush2.msra.mxu0 0.0
        %1305 = vmatprep.subr.mxu0 0.0
        %1306 = vmatpush2.msra.mxu0 0.0
        %1307 = vmatprep.subr.mxu0 0.0
        %1308 = vmatpush2.msra.mxu0 0.0
        %1309 = vmatprep.subr.mxu0 0.0
        %1310 = vmatpush2.msra.mxu0 0.0
        %1311 = vmatprep.subr.mxu0 0.0
        %1312 = vmatpush2.msra.mxu0 0.0
        %1313 = vmatprep.subr.mxu0 0.0
        %1314 = vmatpush2.msra.mxu0 0.0
        %1315 = vmatprep.subr.mxu0 0.0
        %1316 = vmatpush2.msra.mxu0 0.0
        %1317 = vmatprep.subr.mxu0 0.0
        %1318 = vmatpush2.msra.mxu0 0.0
        %1319 = vmatprep.subr.mxu0 0.0
        %1320 = vmatpush2.msra.mxu0 0.0
        %1321 = vmatprep.subr.mxu0 0.0
        %1322 = vmatpush2.msra.mxu0 0.0
        %1323 = vmatprep.mubr.f32.mxu0 0.0
        %1324 = vmatmul.mubr.f32.gmra.mxu0 %v1159
        %v1325 = vpop.f32.mrf.mxu0
        %v1326 = vadd.f32 %v1237, %v1325
        %v1327 = vpop.f32.mrf.mxu0
        %v1328 = vadd.f32 %v1239, %v1327
        %1329 = vmatprep.mubr.f32.mxu0 0.0
        %1330 = vmatmul.mubr.f32.gmra.mxu0 %v1162
        %v1331 = vpop.f32.mrf.mxu0
        %v1332 = vadd.f32 %v1243, %v1331
        %v1333 = vpop.f32.mrf.mxu0
        %v1334 = vadd.f32 %v1245, %v1333
        %1335 = vmatprep.mubr.f32.mxu0 0.0
        %1336 = vmatmul.mubr.f32.gmra.mxu0 %v1165
        %v1337 = vpop.f32.mrf.mxu0
        %v1338 = vadd.f32 %v1249, %v1337
        %v1339 = vpop.f32.mrf.mxu0
        %v1340 = vadd.f32 %v1251, %v1339
        %1341 = vmatprep.mubr.f32.mxu0 0.0
        %1342 = vmatmul.mubr.f32.gmra.mxu0 %v1168
        %v1343 = vpop.f32.mrf.mxu0
        %v1344 = vadd.f32 %v1255, %v1343
        %v1345 = vpop.f32.mrf.mxu0
        %v1346 = vadd.f32 %v1257, %v1345
        %1347 = vdwg.mxu0
        %1348 = vmatprep.subr.mxu0 %v856
        %1349 = vmatpush1.msra.mxu0 %v855
        %1350 = vmatprep.subr.mxu0 %v852
        %1351 = vmatpush1.msra.mxu0 %v851
        %1352 = vmatprep.subr.mxu0 %v848
        %1353 = vmatpush1.msra.mxu0 %v847
        %1354 = vmatprep.subr.mxu0 %v844
        %1355 = vmatpush1.msra.mxu0 %v843
        %1356 = vmatprep.subr.mxu0 %v791
        %1357 = vmatpush1.msra.mxu0 %v790
        %1358 = vmatprep.subr.mxu0 %v787
        %1359 = vmatpush1.msra.mxu0 %v786
        %1360 = vmatprep.subr.mxu0 %v783
        %1361 = vmatpush1.msra.mxu0 %v782
        %1362 = vmatprep.subr.mxu0 %v779
        %1363 = vmatpush1.msra.mxu0 %v778
        %1364 = vmatprep.subr.mxu0 %v726
        %1365 = vmatpush1.msra.mxu0 %v725
        %1366 = vmatprep.subr.mxu0 %v722
        %1367 = vmatpush1.msra.mxu0 %v721
        %1368 = vmatprep.subr.mxu0 %v718
        %1369 = vmatpush1.msra.mxu0 %v717
        %1370 = vmatprep.subr.mxu0 %v714
        %1371 = vmatpush1.msra.mxu0 %v713
        %1372 = vmatprep.subr.mxu0 %v661
        %1373 = vmatpush1.msra.mxu0 %v660
        %1374 = vmatprep.subr.mxu0 %v657
        %1375 = vmatpush1.msra.mxu0 %v656
        %1376 = vmatprep.subr.mxu0 %v653
        %1377 = vmatpush1.msra.mxu0 %v652
        %1378 = vmatprep.subr.mxu0 %v649
        %1379 = vmatpush1.msra.mxu0 %v648
        %1380 = vmatprep.subr.mxu0 %v1067
        %1381 = vmatpush2.msra.mxu0 %v1066
        %1382 = vmatprep.subr.mxu0 %v1063
        %1383 = vmatpush2.msra.mxu0 %v1062
        %1384 = vmatprep.subr.mxu0 %v1059
        %1385 = vmatpush2.msra.mxu0 %v1058
        %1386 = vmatprep.subr.mxu0 %v1055
        %1387 = vmatpush2.msra.mxu0 %v1054
        %1388 = vmatprep.subr.mxu0 %v1002
        %1389 = vmatpush2.msra.mxu0 %v1001
        %1390 = vmatprep.subr.mxu0 %v998
        %1391 = vmatpush2.msra.mxu0 %v997
        %1392 = vmatprep.subr.mxu0 %v994
        %1393 = vmatpush2.msra.mxu0 %v993
        %1394 = vmatprep.subr.mxu0 %v990
        %1395 = vmatpush2.msra.mxu0 %v989
        %1396 = vmatprep.subr.mxu0 %v937
        %1397 = vmatpush2.msra.mxu0 %v936
        %1398 = vmatprep.subr.mxu0 %v933
        %1399 = vmatpush2.msra.mxu0 %v932
        %1400 = vmatprep.subr.mxu0 %v929
        %1401 = vmatpush2.msra.mxu0 %v928
        %1402 = vmatprep.subr.mxu0 %v925
        %1403 = vmatpush2.msra.mxu0 %v924
        %1404 = vmatprep.subr.mxu0 %v872
        %1405 = vmatpush2.msra.mxu0 %v871
        %1406 = vmatprep.subr.mxu0 %v868
        %1407 = vmatpush2.msra.mxu0 %v867
        %1408 = vmatprep.subr.mxu0 %v864
        %1409 = vmatpush2.msra.mxu0 %v863
        %1410 = vmatprep.subr.mxu0 %v860
        %1411 = vmatpush2.msra.mxu0 %v859
        %1412 = vmatprep.mubr.f32.mxu0 %v568
        %1413 = vmatmul.mubr.f32.gmra.mxu0 %v567
        %v1414 = vpop.f32.mrf.mxu0
        %v1415 = vadd.f32 %v1140, %v1414
        %v1416 = vpop.f32.mrf.mxu0
        %v1417 = vadd.f32 %v1140, %v1416
        %1418 = vmatprep.mubr.f32.mxu0 %v571
        %1419 = vmatmul.mubr.f32.gmra.mxu0 %v570
        %v1420 = vpop.f32.mrf.mxu0
        %v1421 = vadd.f32 %v1145, %v1420
        %v1422 = vpop.f32.mrf.mxu0
        %v1423 = vadd.f32 %v1145, %v1422
        %1424 = vmatprep.mubr.f32.mxu0 %v574
        %1425 = vmatmul.mubr.f32.gmra.mxu0 %v573
        %v1426 = vpop.f32.mrf.mxu0
        %v1427 = vadd.f32 %v1150, %v1426
        %v1428 = vpop.f32.mrf.mxu0
        %v1429 = vadd.f32 %v1150, %v1428
        %1430 = vmatprep.mubr.f32.mxu0 %v577
        %1431 = vmatmul.mubr.f32.gmra.mxu0 %v576
        %v1432 = vpop.f32.mrf.mxu0
        %v1433 = vadd.f32 %v1155, %v1432
        %v1434 = vpop.f32.mrf.mxu0
        %v1435 = vadd.f32 %v1155, %v1434
        %1436 = vdwg.mxu0
        %1437 = vmatprep.subr.mxu0 0.0
        %1438 = vmatpush1.msra.mxu0 0.0
        %1439 = vmatprep.subr.mxu0 0.0
        %1440 = vmatpush1.msra.mxu0 0.0
        %1441 = vmatprep.subr.mxu0 0.0
        %1442 = vmatpush1.msra.mxu0 0.0
        %1443 = vmatprep.subr.mxu0 0.0
        %1444 = vmatpush1.msra.mxu0 0.0
        %1445 = vmatprep.subr.mxu0 0.0
        %1446 = vmatpush1.msra.mxu0 0.0
        %1447 = vmatprep.subr.mxu0 0.0
        %1448 = vmatpush1.msra.mxu0 0.0
        %1449 = vmatprep.subr.mxu0 0.0
        %1450 = vmatpush1.msra.mxu0 0.0
        %1451 = vmatprep.subr.mxu0 0.0
        %1452 = vmatpush1.msra.mxu0 0.0
        %1453 = vmatprep.subr.mxu0 0.0
        %1454 = vmatpush1.msra.mxu0 0.0
        %1455 = vmatprep.subr.mxu0 0.0
        %1456 = vmatpush1.msra.mxu0 0.0
        %1457 = vmatprep.subr.mxu0 0.0
        %1458 = vmatpush1.msra.mxu0 0.0
        %1459 = vmatprep.subr.mxu0 0.0
        %1460 = vmatpush1.msra.mxu0 0.0
        %1461 = vmatprep.subr.mxu0 %v1132
        %1462 = vmatpush1.msra.mxu0 %v1131
        %1463 = vmatprep.subr.mxu0 %v1128
        %1464 = vmatpush1.msra.mxu0 %v1127
        %1465 = vmatprep.subr.mxu0 %v1124
        %1466 = vmatpush1.msra.mxu0 %v1123
        %1467 = vmatprep.subr.mxu0 %v1120
        %1468 = vmatpush1.msra.mxu0 %v1119
        %1469 = vmatprep.subr.mxu0 0.0
        %1470 = vmatpush2.msra.mxu0 0.0
        %1471 = vmatprep.subr.mxu0 0.0
        %1472 = vmatpush2.msra.mxu0 0.0
        %1473 = vmatprep.subr.mxu0 0.0
        %1474 = vmatpush2.msra.mxu0 0.0
        %1475 = vmatprep.subr.mxu0 0.0
        %1476 = vmatpush2.msra.mxu0 0.0
        %1477 = vmatprep.subr.mxu0 0.0
        %1478 = vmatpush2.msra.mxu0 0.0
        %1479 = vmatprep.subr.mxu0 0.0
        %1480 = vmatpush2.msra.mxu0 0.0
        %1481 = vmatprep.subr.mxu0 0.0
        %1482 = vmatpush2.msra.mxu0 0.0
        %1483 = vmatprep.subr.mxu0 0.0
        %1484 = vmatpush2.msra.mxu0 0.0
        %1485 = vmatprep.subr.mxu0 0.0
        %1486 = vmatpush2.msra.mxu0 0.0
        %1487 = vmatprep.subr.mxu0 0.0
        %1488 = vmatpush2.msra.mxu0 0.0
        %1489 = vmatprep.subr.mxu0 0.0
        %1490 = vmatpush2.msra.mxu0 0.0
        %1491 = vmatprep.subr.mxu0 0.0
        %1492 = vmatpush2.msra.mxu0 0.0
        %1493 = vmatprep.subr.mxu0 0.0
        %1494 = vmatpush2.msra.mxu0 0.0
        %1495 = vmatprep.subr.mxu0 0.0
        %1496 = vmatpush2.msra.mxu0 0.0
        %1497 = vmatprep.subr.mxu0 0.0
        %1498 = vmatpush2.msra.mxu0 0.0
        %1499 = vmatprep.subr.mxu0 0.0
        %1500 = vmatpush2.msra.mxu0 0.0
        %1501 = vmatprep.mubr.f32.mxu0 0.0
        %1502 = vmatmul.mubr.f32.gmra.mxu0 %v1159
        %v1503 = vpop.f32.mrf.mxu0
        %v1504 = vadd.f32 %v1415, %v1503
        %v1505 = vpop.f32.mrf.mxu0
        %v1506 = vadd.f32 %v1417, %v1505
        %1507 = vmatprep.mubr.f32.mxu0 0.0
        %1508 = vmatmul.mubr.f32.gmra.mxu0 %v1162
        %v1509 = vpop.f32.mrf.mxu0
        %v1510 = vadd.f32 %v1421, %v1509
        %v1511 = vpop.f32.mrf.mxu0
        %v1512 = vadd.f32 %v1423, %v1511
        %1513 = vmatprep.mubr.f32.mxu0 0.0
        %1514 = vmatmul.mubr.f32.gmra.mxu0 %v1165
        %v1515 = vpop.f32.mrf.mxu0
        %v1516 = vadd.f32 %v1427, %v1515
        %v1517 = vpop.f32.mrf.mxu0
        %v1518 = vadd.f32 %v1429, %v1517
        %1519 = vmatprep.mubr.f32.mxu0 0.0
        %1520 = vmatmul.mubr.f32.gmra.mxu0 %v1168
        %v1521 = vpop.f32.mrf.mxu0
        %v1522 = vadd.f32 %v1433, %v1521
        %v1523 = vpop.f32.mrf.mxu0
        %v1524 = vadd.f32 %v1435, %v1523
        %1525 = vdwg.mxu0
        %v1526 = vmax.f32 %v1326, 0.0
        %v1527 = vmax.f32 %v1328, 0.0
        %v1528 = vmax.f32 %v1504, 0.0
        %v1529 = vmax.f32 %v1506, 0.0
        %v1530 = vmax.f32 %v1332, 0.0
        %v1531 = vmax.f32 %v1334, 0.0
        %v1532 = vmax.f32 %v1510, 0.0
        %v1533 = vmax.f32 %v1512, 0.0
        %v1534 = vmax.f32 %v1338, 0.0
        %v1535 = vmax.f32 %v1340, 0.0
        %v1536 = vmax.f32 %v1516, 0.0
        %v1537 = vmax.f32 %v1518, 0.0
        %v1538 = vmax.f32 %v1344, 0.0
        %v1539 = vmax.f32 %v1346, 0.0
        %v1540 = vmax.f32 %v1522, 0.0
        %v1541 = vmax.f32 %v1524, 0.0
        %v1542 = vld [vmem:[%s6] sm:$0xff]
        %v1543 = vld [vmem:[%s6 + $0x8] sm:$0xff]
        %v1544 = vld [vmem:[%s6 + $0x10] sm:$0xff]
        %v1545 = vld [vmem:[%s6 + $0x18] sm:$0xff]
        %v1546 = vld [vmem:[%s6 + $0x20] sm:$0xff]
        %v1547 = vld [vmem:[%s6 + $0x28] sm:$0xff]
        %v1548 = vld [vmem:[%s6 + $0x30] sm:$0xff]
        %v1549 = vld [vmem:[%s6 + $0x38] sm:$0xff]
        %v1550 = vld [vmem:[%s6 + $0x40] sm:$0xff]
        %v1551 = vld [vmem:[%s6 + $0x48] sm:$0xff]
        %v1552 = vld [vmem:[%s6 + $0x50] sm:$0xff]
        %v1553 = vld [vmem:[%s6 + $0x58] sm:$0xff]
        %1554 = vrot.lane.b32.xlu0 %v1526, 17
        %v1555 = vpop.permute.xlu0 %1554
        %1556 = vrot.lane.b32.xlu0 %v1530, 17
        %v1557 = vpop.permute.xlu0 %1556
        %1558 = vrot.lane.b32.xlu0 %v1534, 17
        %v1559 = vpop.permute.xlu0 %1558
        %1560 = vrot.lane.b32.xlu0 %v1538, 17
        %v1561 = vpop.permute.xlu0 %1560
        %1562 = vrot.lane.b32.xlu0 %v1527, 17
        %v1563 = vpop.permute.xlu0 %1562
        %1564 = vrot.lane.b32.xlu0 %v1531, 17
        %v1565 = vpop.permute.xlu0 %1564
        %1566 = vrot.lane.b32.xlu0 %v1535, 17
        %v1567 = vpop.permute.xlu0 %1566
        %1568 = vrot.lane.b32.xlu0 %v1539, 17
        %v1569 = vpop.permute.xlu0 %1568
        %1570 = vrot.lane.b32.xlu0 %v1528, 17
        %v1571 = vpop.permute.xlu0 %1570
        %1572 = vrot.lane.b32.xlu0 %v1532, 17
        %v1573 = vpop.permute.xlu0 %1572
        %1574 = vrot.lane.b32.xlu0 %v1536, 17
        %v1575 = vpop.permute.xlu0 %1574
        %1576 = vrot.lane.b32.xlu0 %v1540, 17
        %v1577 = vpop.permute.xlu0 %1576
        %1578 = vrot.lane.b32.xlu0 %v1529, 17
        %v1579 = vpop.permute.xlu0 %1578
        %1580 = vrot.lane.b32.xlu0 %v1533, 17
        %v1581 = vpop.permute.xlu0 %1580
        %1582 = vrot.lane.b32.xlu0 %v1537, 17
        %v1583 = vpop.permute.xlu0 %1582
        %1584 = vrot.lane.b32.xlu0 %v1541, 17
        %v1585 = vpop.permute.xlu0 %1584
        %v1586 = vsel %vm629, %v1571, %v1579
        %v1587 = vsel %vm629, %v1573, %v1581
        %v1588 = vsel %vm629, %v1575, %v1583
        %v1589 = vsel %vm629, %v1577, %v1585
        %v1590 = vsel %vm629, %v1563, %v1571
        %v1591 = vsel %vm629, %v1565, %v1573
        %v1592 = vsel %vm629, %v1567, %v1575
        %v1593 = vsel %vm629, %v1569, %v1577
        %v1594 = vsel %vm629, %v1555, %v1563
        %v1595 = vsel %vm629, %v1557, %v1565
        %v1596 = vsel %vm629, %v1559, %v1567
        %v1597 = vsel %vm629, %v1561, %v1569
        %v1598 = vsel %vm629, %v1579, %v1555
        %v1599 = vsel %vm629, %v1581, %v1557
        %v1600 = vsel %vm629, %v1583, %v1559
        %v1601 = vsel %vm629, %v1585, %v1561
        %v1602 = vmul.f32 %v1598, %v426
        %v1603 = vmul.f32 %v1594, %v430
        %v1604 = vmul.f32 %v1590, %v434
        %v1605 = vmul.f32 %v1586, %v438
        %v1606 = vmul.f32 %v1599, %v426
        %v1607 = vmul.f32 %v1595, %v430
        %v1608 = vmul.f32 %v1591, %v434
        %v1609 = vmul.f32 %v1587, %v438
        %v1610 = vmul.f32 %v1600, %v426
        %v1611 = vmul.f32 %v1596, %v430
        %v1612 = vmul.f32 %v1592, %v434
        %v1613 = vmul.f32 %v1588, %v438
        %v1614 = vmul.f32 %v1601, %v426
        %v1615 = vmul.f32 %v1597, %v430
        %v1616 = vmul.f32 %v1593, %v434
        %v1617 = vmul.f32 %v1589, %v438
        %1618 = vrot.lane.b32.xlu0 %v1526, 16
        %v1619 = vpop.permute.xlu0 %1618
        %1620 = vrot.lane.b32.xlu0 %v1530, 16
        %v1621 = vpop.permute.xlu0 %1620
        %1622 = vrot.lane.b32.xlu0 %v1534, 16
        %v1623 = vpop.permute.xlu0 %1622
        %1624 = vrot.lane.b32.xlu0 %v1538, 16
        %v1625 = vpop.permute.xlu0 %1624
        %1626 = vrot.lane.b32.xlu0 %v1527, 16
        %v1627 = vpop.permute.xlu0 %1626
        %1628 = vrot.lane.b32.xlu0 %v1531, 16
        %v1629 = vpop.permute.xlu0 %1628
        %1630 = vrot.lane.b32.xlu0 %v1535, 16
        %v1631 = vpop.permute.xlu0 %1630
        %1632 = vrot.lane.b32.xlu0 %v1539, 16
        %v1633 = vpop.permute.xlu0 %1632
        %1634 = vrot.lane.b32.xlu0 %v1528, 16
        %v1635 = vpop.permute.xlu0 %1634
        %1636 = vrot.lane.b32.xlu0 %v1532, 16
        %v1637 = vpop.permute.xlu0 %1636
        %1638 = vrot.lane.b32.xlu0 %v1536, 16
        %v1639 = vpop.permute.xlu0 %1638
        %1640 = vrot.lane.b32.xlu0 %v1540, 16
        %v1641 = vpop.permute.xlu0 %1640
        %1642 = vrot.lane.b32.xlu0 %v1529, 16
        %v1643 = vpop.permute.xlu0 %1642
        %1644 = vrot.lane.b32.xlu0 %v1533, 16
        %v1645 = vpop.permute.xlu0 %1644
        %1646 = vrot.lane.b32.xlu0 %v1537, 16
        %v1647 = vpop.permute.xlu0 %1646
        %1648 = vrot.lane.b32.xlu0 %v1541, 16
        %v1649 = vpop.permute.xlu0 %1648
        %v1650 = vsel %vm694, %v1635, %v1643
        %v1651 = vsel %vm694, %v1637, %v1645
        %v1652 = vsel %vm694, %v1639, %v1647
        %v1653 = vsel %vm694, %v1641, %v1649
        %v1654 = vsel %vm694, %v1627, %v1635
        %v1655 = vsel %vm694, %v1629, %v1637
        %v1656 = vsel %vm694, %v1631, %v1639
        %v1657 = vsel %vm694, %v1633, %v1641
        %v1658 = vsel %vm694, %v1619, %v1627
        %v1659 = vsel %vm694, %v1621, %v1629
        %v1660 = vsel %vm694, %v1623, %v1631
        %v1661 = vsel %vm694, %v1625, %v1633
        %v1662 = vsel %vm694, %v1643, %v1619
        %v1663 = vsel %vm694, %v1645, %v1621
        %v1664 = vsel %vm694, %v1647, %v1623
        %v1665 = vsel %vm694, %v1649, %v1625
        %v1666 = vmul.f32 %v1662, %v442
        %v1667 = vmul.f32 %v1658, %v446
        %v1668 = vmul.f32 %v1654, %v450
        %v1669 = vmul.f32 %v1650, %v454
        %v1670 = vmul.f32 %v1663, %v442
        %v1671 = vmul.f32 %v1659, %v446
        %v1672 = vmul.f32 %v1655, %v450
        %v1673 = vmul.f32 %v1651, %v454
        %v1674 = vmul.f32 %v1664, %v442
        %v1675 = vmul.f32 %v1660, %v446
        %v1676 = vmul.f32 %v1656, %v450
        %v1677 = vmul.f32 %v1652, %v454
        %v1678 = vmul.f32 %v1665, %v442
        %v1679 = vmul.f32 %v1661, %v446
        %v1680 = vmul.f32 %v1657, %v450
        %v1681 = vmul.f32 %v1653, %v454
        %1682 = vrot.lane.b32.xlu0 %v1526, 15
        %v1683 = vpop.permute.xlu0 %1682
        %1684 = vrot.lane.b32.xlu0 %v1530, 15
        %v1685 = vpop.permute.xlu0 %1684
        %1686 = vrot.lane.b32.xlu0 %v1534, 15
        %v1687 = vpop.permute.xlu0 %1686
        %1688 = vrot.lane.b32.xlu0 %v1538, 15
        %v1689 = vpop.permute.xlu0 %1688
        %1690 = vrot.lane.b32.xlu0 %v1527, 15
        %v1691 = vpop.permute.xlu0 %1690
        %1692 = vrot.lane.b32.xlu0 %v1531, 15
        %v1693 = vpop.permute.xlu0 %1692
        %1694 = vrot.lane.b32.xlu0 %v1535, 15
        %v1695 = vpop.permute.xlu0 %1694
        %1696 = vrot.lane.b32.xlu0 %v1539, 15
        %v1697 = vpop.permute.xlu0 %1696
        %1698 = vrot.lane.b32.xlu0 %v1528, 15
        %v1699 = vpop.permute.xlu0 %1698
        %1700 = vrot.lane.b32.xlu0 %v1532, 15
        %v1701 = vpop.permute.xlu0 %1700
        %1702 = vrot.lane.b32.xlu0 %v1536, 15
        %v1703 = vpop.permute.xlu0 %1702
        %1704 = vrot.lane.b32.xlu0 %v1540, 15
        %v1705 = vpop.permute.xlu0 %1704
        %1706 = vrot.lane.b32.xlu0 %v1529, 15
        %v1707 = vpop.permute.xlu0 %1706
        %1708 = vrot.lane.b32.xlu0 %v1533, 15
        %v1709 = vpop.permute.xlu0 %1708
        %1710 = vrot.lane.b32.xlu0 %v1537, 15
        %v1711 = vpop.permute.xlu0 %1710
        %1712 = vrot.lane.b32.xlu0 %v1541, 15
        %v1713 = vpop.permute.xlu0 %1712
        %v1714 = vsel %vm759, %v1699, %v1707
        %v1715 = vsel %vm759, %v1701, %v1709
        %v1716 = vsel %vm759, %v1703, %v1711
        %v1717 = vsel %vm759, %v1705, %v1713
        %v1718 = vsel %vm759, %v1691, %v1699
        %v1719 = vsel %vm759, %v1693, %v1701
        %v1720 = vsel %vm759, %v1695, %v1703
        %v1721 = vsel %vm759, %v1697, %v1705
        %v1722 = vsel %vm759, %v1683, %v1691
        %v1723 = vsel %vm759, %v1685, %v1693
        %v1724 = vsel %vm759, %v1687, %v1695
        %v1725 = vsel %vm759, %v1689, %v1697
        %v1726 = vsel %vm759, %v1707, %v1683
        %v1727 = vsel %vm759, %v1709, %v1685
        %v1728 = vsel %vm759, %v1711, %v1687
        %v1729 = vsel %vm759, %v1713, %v1689
        %v1730 = vmul.f32 %v1726, %v458
        %v1731 = vmul.f32 %v1722, %v462
        %v1732 = vmul.f32 %v1718, %v466
        %v1733 = vmul.f32 %v1714, %v470
        %v1734 = vmul.f32 %v1727, %v458
        %v1735 = vmul.f32 %v1723, %v462
        %v1736 = vmul.f32 %v1719, %v466
        %v1737 = vmul.f32 %v1715, %v470
        %v1738 = vmul.f32 %v1728, %v458
        %v1739 = vmul.f32 %v1724, %v462
        %v1740 = vmul.f32 %v1720, %v466
        %v1741 = vmul.f32 %v1716, %v470
        %v1742 = vmul.f32 %v1729, %v458
        %v1743 = vmul.f32 %v1725, %v462
        %v1744 = vmul.f32 %v1721, %v466
        %v1745 = vmul.f32 %v1717, %v470
        %1746 = vrot.lane.b32.xlu0 %v1526, 1
        %v1747 = vpop.permute.xlu0 %1746
        %1748 = vrot.lane.b32.xlu0 %v1530, 1
        %v1749 = vpop.permute.xlu0 %1748
        %1750 = vrot.lane.b32.xlu0 %v1534, 1
        %v1751 = vpop.permute.xlu0 %1750
        %1752 = vrot.lane.b32.xlu0 %v1538, 1
        %v1753 = vpop.permute.xlu0 %1752
        %1754 = vrot.lane.b32.xlu0 %v1527, 1
        %v1755 = vpop.permute.xlu0 %1754
        %1756 = vrot.lane.b32.xlu0 %v1531, 1
        %v1757 = vpop.permute.xlu0 %1756
        %1758 = vrot.lane.b32.xlu0 %v1535, 1
        %v1759 = vpop.permute.xlu0 %1758
        %1760 = vrot.lane.b32.xlu0 %v1539, 1
        %v1761 = vpop.permute.xlu0 %1760
        %1762 = vrot.lane.b32.xlu0 %v1528, 1
        %v1763 = vpop.permute.xlu0 %1762
        %1764 = vrot.lane.b32.xlu0 %v1532, 1
        %v1765 = vpop.permute.xlu0 %1764
        %1766 = vrot.lane.b32.xlu0 %v1536, 1
        %v1767 = vpop.permute.xlu0 %1766
        %1768 = vrot.lane.b32.xlu0 %v1540, 1
        %v1769 = vpop.permute.xlu0 %1768
        %1770 = vrot.lane.b32.xlu0 %v1529, 1
        %v1771 = vpop.permute.xlu0 %1770
        %1772 = vrot.lane.b32.xlu0 %v1533, 1
        %v1773 = vpop.permute.xlu0 %1772
        %1774 = vrot.lane.b32.xlu0 %v1537, 1
        %v1775 = vpop.permute.xlu0 %1774
        %1776 = vrot.lane.b32.xlu0 %v1541, 1
        %v1777 = vpop.permute.xlu0 %1776
        %v1778 = vsel %vm824, %v1763, %v1771
        %v1779 = vsel %vm824, %v1765, %v1773
        %v1780 = vsel %vm824, %v1767, %v1775
        %v1781 = vsel %vm824, %v1769, %v1777
        %v1782 = vsel %vm824, %v1755, %v1763
        %v1783 = vsel %vm824, %v1757, %v1765
        %v1784 = vsel %vm824, %v1759, %v1767
        %v1785 = vsel %vm824, %v1761, %v1769
        %v1786 = vsel %vm824, %v1747, %v1755
        %v1787 = vsel %vm824, %v1749, %v1757
        %v1788 = vsel %vm824, %v1751, %v1759
        %v1789 = vsel %vm824, %v1753, %v1761
        %v1790 = vsel %vm824, %v1771, %v1747
        %v1791 = vsel %vm824, %v1773, %v1749
        %v1792 = vsel %vm824, %v1775, %v1751
        %v1793 = vsel %vm824, %v1777, %v1753
        %v1794 = vmul.f32 %v1790, %v474
        %v1795 = vmul.f32 %v1786, %v478
        %v1796 = vmul.f32 %v1782, %v482
        %v1797 = vmul.f32 %v1778, %v486
        %v1798 = vmul.f32 %v1791, %v474
        %v1799 = vmul.f32 %v1787, %v478
        %v1800 = vmul.f32 %v1783, %v482
        %v1801 = vmul.f32 %v1779, %v486
        %v1802 = vmul.f32 %v1792, %v474
        %v1803 = vmul.f32 %v1788, %v478
        %v1804 = vmul.f32 %v1784, %v482
        %v1805 = vmul.f32 %v1780, %v486
        %v1806 = vmul.f32 %v1793, %v474
        %v1807 = vmul.f32 %v1789, %v478
        %v1808 = vmul.f32 %v1785, %v482
        %v1809 = vmul.f32 %v1781, %v486
        %v1810 = vmul.f32 %v1526, %v490
        %v1811 = vmul.f32 %v1527, %v494
        %v1812 = vmul.f32 %v1528, %v498
        %v1813 = vmul.f32 %v1529, %v502
        %v1814 = vmul.f32 %v1530, %v490
        %v1815 = vmul.f32 %v1531, %v494
        %v1816 = vmul.f32 %v1532, %v498
        %v1817 = vmul.f32 %v1533, %v502
        %v1818 = vmul.f32 %v1534, %v490
        %v1819 = vmul.f32 %v1535, %v494
        %v1820 = vmul.f32 %v1536, %v498
        %v1821 = vmul.f32 %v1537, %v502
        %v1822 = vmul.f32 %v1538, %v490
        %v1823 = vmul.f32 %v1539, %v494
        %v1824 = vmul.f32 %v1540, %v498
        %v1825 = vmul.f32 %v1541, %v502
        %1826 = vrot.lane.b32.xlu0 %v1526, 127
        %v1827 = vpop.permute.xlu0 %1826
        %1828 = vrot.lane.b32.xlu0 %v1530, 127
        %v1829 = vpop.permute.xlu0 %1828
        %1830 = vrot.lane.b32.xlu0 %v1534, 127
        %v1831 = vpop.permute.xlu0 %1830
        %1832 = vrot.lane.b32.xlu0 %v1538, 127
        %v1833 = vpop.permute.xlu0 %1832
        %1834 = vrot.lane.b32.xlu0 %v1527, 127
        %v1835 = vpop.permute.xlu0 %1834
        %1836 = vrot.lane.b32.xlu0 %v1531, 127
        %v1837 = vpop.permute.xlu0 %1836
        %1838 = vrot.lane.b32.xlu0 %v1535, 127
        %v1839 = vpop.permute.xlu0 %1838
        %1840 = vrot.lane.b32.xlu0 %v1539, 127
        %v1841 = vpop.permute.xlu0 %1840
        %1842 = vrot.lane.b32.xlu0 %v1528, 127
        %v1843 = vpop.permute.xlu0 %1842
        %1844 = vrot.lane.b32.xlu0 %v1532, 127
        %v1845 = vpop.permute.xlu0 %1844
        %1846 = vrot.lane.b32.xlu0 %v1536, 127
        %v1847 = vpop.permute.xlu0 %1846
        %1848 = vrot.lane.b32.xlu0 %v1540, 127
        %v1849 = vpop.permute.xlu0 %1848
        %1850 = vrot.lane.b32.xlu0 %v1529, 127
        %v1851 = vpop.permute.xlu0 %1850
        %1852 = vrot.lane.b32.xlu0 %v1533, 127
        %v1853 = vpop.permute.xlu0 %1852
        %1854 = vrot.lane.b32.xlu0 %v1537, 127
        %v1855 = vpop.permute.xlu0 %1854
        %1856 = vrot.lane.b32.xlu0 %v1541, 127
        %v1857 = vpop.permute.xlu0 %1856
        %v1858 = vsel %vm905, %v1843, %v1851
        %v1859 = vsel %vm905, %v1845, %v1853
        %v1860 = vsel %vm905, %v1847, %v1855
        %v1861 = vsel %vm905, %v1849, %v1857
        %v1862 = vsel %vm905, %v1835, %v1843
        %v1863 = vsel %vm905, %v1837, %v1845
        %v1864 = vsel %vm905, %v1839, %v1847
        %v1865 = vsel %vm905, %v1841, %v1849
        %v1866 = vsel %vm905, %v1827, %v1835
        %v1867 = vsel %vm905, %v1829, %v1837
        %v1868 = vsel %vm905, %v1831, %v1839
        %v1869 = vsel %vm905, %v1833, %v1841
        %v1870 = vsel %vm905, %v1851, %v1827
        %v1871 = vsel %vm905, %v1853, %v1829
        %v1872 = vsel %vm905, %v1855, %v1831
        %v1873 = vsel %vm905, %v1857, %v1833
        %v1874 = vmul.f32 %v1866, %v506
        %v1875 = vmul.f32 %v1862, %v510
        %v1876 = vmul.f32 %v1858, %v514
        %v1877 = vmul.f32 %v1870, %v518
        %v1878 = vmul.f32 %v1867, %v506
        %v1879 = vmul.f32 %v1863, %v510
        %v1880 = vmul.f32 %v1859, %v514
        %v1881 = vmul.f32 %v1871, %v518
        %v1882 = vmul.f32 %v1868, %v506
        %v1883 = vmul.f32 %v1864, %v510
        %v1884 = vmul.f32 %v1860, %v514
        %v1885 = vmul.f32 %v1872, %v518
        %v1886 = vmul.f32 %v1869, %v506
        %v1887 = vmul.f32 %v1865, %v510
        %v1888 = vmul.f32 %v1861, %v514
        %v1889 = vmul.f32 %v1873, %v518
        %1890 = vrot.lane.b32.xlu0 %v1526, 113
        %v1891 = vpop.permute.xlu0 %1890
        %1892 = vrot.lane.b32.xlu0 %v1530, 113
        %v1893 = vpop.permute.xlu0 %1892
        %1894 = vrot.lane.b32.xlu0 %v1534, 113
        %v1895 = vpop.permute.xlu0 %1894
        %1896 = vrot.lane.b32.xlu0 %v1538, 113
        %v1897 = vpop.permute.xlu0 %1896
        %1898 = vrot.lane.b32.xlu0 %v1527, 113
        %v1899 = vpop.permute.xlu0 %1898
        %1900 = vrot.lane.b32.xlu0 %v1531, 113
        %v1901 = vpop.permute.xlu0 %1900
        %1902 = vrot.lane.b32.xlu0 %v1535, 113
        %v1903 = vpop.permute.xlu0 %1902
        %1904 = vrot.lane.b32.xlu0 %v1539, 113
        %v1905 = vpop.permute.xlu0 %1904
        %1906 = vrot.lane.b32.xlu0 %v1528, 113
        %v1907 = vpop.permute.xlu0 %1906
        %1908 = vrot.lane.b32.xlu0 %v1532, 113
        %v1909 = vpop.permute.xlu0 %1908
        %1910 = vrot.lane.b32.xlu0 %v1536, 113
        %v1911 = vpop.permute.xlu0 %1910
        %1912 = vrot.lane.b32.xlu0 %v1540, 113
        %v1913 = vpop.permute.xlu0 %1912
        %1914 = vrot.lane.b32.xlu0 %v1529, 113
        %v1915 = vpop.permute.xlu0 %1914
        %1916 = vrot.lane.b32.xlu0 %v1533, 113
        %v1917 = vpop.permute.xlu0 %1916
        %1918 = vrot.lane.b32.xlu0 %v1537, 113
        %v1919 = vpop.permute.xlu0 %1918
        %1920 = vrot.lane.b32.xlu0 %v1541, 113
        %v1921 = vpop.permute.xlu0 %1920
        %v1922 = vsel %vm970, %v1907, %v1915
        %v1923 = vsel %vm970, %v1909, %v1917
        %v1924 = vsel %vm970, %v1911, %v1919
        %v1925 = vsel %vm970, %v1913, %v1921
        %v1926 = vsel %vm970, %v1899, %v1907
        %v1927 = vsel %vm970, %v1901, %v1909
        %v1928 = vsel %vm970, %v1903, %v1911
        %v1929 = vsel %vm970, %v1905, %v1913
        %v1930 = vsel %vm970, %v1891, %v1899
        %v1931 = vsel %vm970, %v1893, %v1901
        %v1932 = vsel %vm970, %v1895, %v1903
        %v1933 = vsel %vm970, %v1897, %v1905
        %v1934 = vsel %vm970, %v1915, %v1891
        %v1935 = vsel %vm970, %v1917, %v1893
        %v1936 = vsel %vm970, %v1919, %v1895
        %v1937 = vsel %vm970, %v1921, %v1897
        %v1938 = vmul.f32 %v1930, %v522
        %v1939 = vmul.f32 %v1926, %v526
        %v1940 = vmul.f32 %v1922, %v530
        %v1941 = vmul.f32 %v1934, %v534
        %v1942 = vmul.f32 %v1931, %v522
        %v1943 = vmul.f32 %v1927, %v526
        %v1944 = vmul.f32 %v1923, %v530
        %v1945 = vmul.f32 %v1935, %v534
        %v1946 = vmul.f32 %v1932, %v522
        %v1947 = vmul.f32 %v1928, %v526
        %v1948 = vmul.f32 %v1924, %v530
        %v1949 = vmul.f32 %v1936, %v534
        %v1950 = vmul.f32 %v1933, %v522
        %v1951 = vmul.f32 %v1929, %v526
        %v1952 = vmul.f32 %v1925, %v530
        %v1953 = vmul.f32 %v1937, %v534
        %1954 = vrot.lane.b32.xlu0 %v1526, 112
        %v1955 = vpop.permute.xlu0 %1954
        %1956 = vrot.lane.b32.xlu0 %v1530, 112
        %v1957 = vpop.permute.xlu0 %1956
        %1958 = vrot.lane.b32.xlu0 %v1534, 112
        %v1959 = vpop.permute.xlu0 %1958
        %1960 = vrot.lane.b32.xlu0 %v1538, 112
        %v1961 = vpop.permute.xlu0 %1960
        %1962 = vrot.lane.b32.xlu0 %v1527, 112
        %v1963 = vpop.permute.xlu0 %1962
        %1964 = vrot.lane.b32.xlu0 %v1531, 112
        %v1965 = vpop.permute.xlu0 %1964
        %1966 = vrot.lane.b32.xlu0 %v1535, 112
        %v1967 = vpop.permute.xlu0 %1966
        %1968 = vrot.lane.b32.xlu0 %v1539, 112
        %v1969 = vpop.permute.xlu0 %1968
        %1970 = vrot.lane.b32.xlu0 %v1528, 112
        %v1971 = vpop.permute.xlu0 %1970
        %1972 = vrot.lane.b32.xlu0 %v1532, 112
        %v1973 = vpop.permute.xlu0 %1972
        %1974 = vrot.lane.b32.xlu0 %v1536, 112
        %v1975 = vpop.permute.xlu0 %1974
        %1976 = vrot.lane.b32.xlu0 %v1540, 112
        %v1977 = vpop.permute.xlu0 %1976
        %1978 = vrot.lane.b32.xlu0 %v1529, 112
        %v1979 = vpop.permute.xlu0 %1978
        %1980 = vrot.lane.b32.xlu0 %v1533, 112
        %v1981 = vpop.permute.xlu0 %1980
        %1982 = vrot.lane.b32.xlu0 %v1537, 112
        %v1983 = vpop.permute.xlu0 %1982
        %1984 = vrot.lane.b32.xlu0 %v1541, 112
        %v1985 = vpop.permute.xlu0 %1984
        %v1986 = vsel %vm1035, %v1971, %v1979
        %v1987 = vsel %vm1035, %v1973, %v1981
        %v1988 = vsel %vm1035, %v1975, %v1983
        %v1989 = vsel %vm1035, %v1977, %v1985
        %v1990 = vsel %vm1035, %v1963, %v1971
        %v1991 = vsel %vm1035, %v1965, %v1973
        %v1992 = vsel %vm1035, %v1967, %v1975
        %v1993 = vsel %vm1035, %v1969, %v1977
        %v1994 = vsel %vm1035, %v1955, %v1963
        %v1995 = vsel %vm1035, %v1957, %v1965
        %v1996 = vsel %vm1035, %v1959, %v1967
        %v1997 = vsel %vm1035, %v1961, %v1969
        %v1998 = vsel %vm1035, %v1979, %v1955
        %v1999 = vsel %vm1035, %v1981, %v1957
        %v2000 = vsel %vm1035, %v1983, %v1959
        %v2001 = vsel %vm1035, %v1985, %v1961
        %v2002 = vmul.f32 %v1994, %v538
        %v2003 = vmul.f32 %v1990, %v542
        %v2004 = vmul.f32 %v1986, %v546
        %v2005 = vmul.f32 %v1998, %v550
        %v2006 = vmul.f32 %v1995, %v538
        %v2007 = vmul.f32 %v1991, %v542
        %v2008 = vmul.f32 %v1987, %v546
        %v2009 = vmul.f32 %v1999, %v550
        %v2010 = vmul.f32 %v1996, %v538
        %v2011 = vmul.f32 %v1992, %v542
        %v2012 = vmul.f32 %v1988, %v546
        %v2013 = vmul.f32 %v2000, %v550
        %v2014 = vmul.f32 %v1997, %v538
        %v2015 = vmul.f32 %v1993, %v542
        %v2016 = vmul.f32 %v1989, %v546
        %v2017 = vmul.f32 %v2001, %v550
        %2018 = vrot.lane.b32.xlu0 %v1526, 111
        %v2019 = vpop.permute.xlu0 %2018
        %2020 = vrot.lane.b32.xlu0 %v1530, 111
        %v2021 = vpop.permute.xlu0 %2020
        %2022 = vrot.lane.b32.xlu0 %v1534, 111
        %v2023 = vpop.permute.xlu0 %2022
        %2024 = vrot.lane.b32.xlu0 %v1538, 111
        %v2025 = vpop.permute.xlu0 %2024
        %2026 = vrot.lane.b32.xlu0 %v1527, 111
        %v2027 = vpop.permute.xlu0 %2026
        %2028 = vrot.lane.b32.xlu0 %v1531, 111
        %v2029 = vpop.permute.xlu0 %2028
        %2030 = vrot.lane.b32.xlu0 %v1535, 111
        %v2031 = vpop.permute.xlu0 %2030
        %2032 = vrot.lane.b32.xlu0 %v1539, 111
        %v2033 = vpop.permute.xlu0 %2032
        %2034 = vrot.lane.b32.xlu0 %v1528, 111
        %v2035 = vpop.permute.xlu0 %2034
        %2036 = vrot.lane.b32.xlu0 %v1532, 111
        %v2037 = vpop.permute.xlu0 %2036
        %2038 = vrot.lane.b32.xlu0 %v1536, 111
        %v2039 = vpop.permute.xlu0 %2038
        %2040 = vrot.lane.b32.xlu0 %v1540, 111
        %v2041 = vpop.permute.xlu0 %2040
        %2042 = vrot.lane.b32.xlu0 %v1529, 111
        %v2043 = vpop.permute.xlu0 %2042
        %2044 = vrot.lane.b32.xlu0 %v1533, 111
        %v2045 = vpop.permute.xlu0 %2044
        %2046 = vrot.lane.b32.xlu0 %v1537, 111
        %v2047 = vpop.permute.xlu0 %2046
        %2048 = vrot.lane.b32.xlu0 %v1541, 111
        %v2049 = vpop.permute.xlu0 %2048
        %v2050 = vsel %vm1100, %v2035, %v2043
        %v2051 = vsel %vm1100, %v2037, %v2045
        %v2052 = vsel %vm1100, %v2039, %v2047
        %v2053 = vsel %vm1100, %v2041, %v2049
        %v2054 = vsel %vm1100, %v2027, %v2035
        %v2055 = vsel %vm1100, %v2029, %v2037
        %v2056 = vsel %vm1100, %v2031, %v2039
        %v2057 = vsel %vm1100, %v2033, %v2041
        %v2058 = vsel %vm1100, %v2019, %v2027
        %v2059 = vsel %vm1100, %v2021, %v2029
        %v2060 = vsel %vm1100, %v2023, %v2031
        %v2061 = vsel %vm1100, %v2025, %v2033
        %v2062 = vsel %vm1100, %v2043, %v2019
        %v2063 = vsel %vm1100, %v2045, %v2021
        %v2064 = vsel %vm1100, %v2047, %v2023
        %v2065 = vsel %vm1100, %v2049, %v2025
        %v2066 = vmul.f32 %v2058, %v554
        %v2067 = vmul.f32 %v2054, %v558
        %v2068 = vmul.f32 %v2050, %v562
        %v2069 = vmul.f32 %v2062, %v566
        %v2070 = vmul.f32 %v2059, %v554
        %v2071 = vmul.f32 %v2055, %v558
        %v2072 = vmul.f32 %v2051, %v562
        %v2073 = vmul.f32 %v2063, %v566
        %v2074 = vmul.f32 %v2060, %v554
        %v2075 = vmul.f32 %v2056, %v558
        %v2076 = vmul.f32 %v2052, %v562
        %v2077 = vmul.f32 %v2064, %v566
        %v2078 = vmul.f32 %v2061, %v554
        %v2079 = vmul.f32 %v2057, %v558
        %v2080 = vmul.f32 %v2053, %v562
        %v2081 = vmul.f32 %v2065, %v566
        %v2082 = vld [vmem:[%s7] sm:$0xff]
        %v2083 = vld [vmem:[%s7 + $0x8] sm:$0xff]
        %v2084 = vld [vmem:[%s7 + $0x10] sm:$0xff]
        %v2085 = vld [vmem:[%s7 + $0x18] sm:$0xff]
        %2087 = vset.pattern.permute.xlu0 0
        %2088 = vperm.xlu0 %2087, %v2082
        %v2089 = vpop.permute.xlu0 %2088
        %2092 = vset.pattern.permute.xlu0 0
        %2093 = vperm.xlu0 %2092, %v2083
        %v2094 = vpop.permute.xlu0 %2093
        %2097 = vset.pattern.permute.xlu0 0
        %2098 = vperm.xlu0 %2097, %v2084
        %v2099 = vpop.permute.xlu0 %2098
        %2102 = vset.pattern.permute.xlu0 0
        %2103 = vperm.xlu0 %2102, %v2085
        %v2104 = vpop.permute.xlu0 %2103
        %v2107 = vsel %vm1157, %v1544, 0
        %v2110 = vsel %vm1157, %v1547, 0
        %v2113 = vsel %vm1157, %v1550, 0
        %v2116 = vsel %vm1157, %v1553, 0
        %2118 = vmatprep.subr.mxu0 %v1807
        %2119 = vmatpush1.msra.mxu0 %v1806
        %2120 = vmatprep.subr.mxu0 %v1803
        %2121 = vmatpush1.msra.mxu0 %v1802
        %2122 = vmatprep.subr.mxu0 %v1799
        %2123 = vmatpush1.msra.mxu0 %v1798
        %2124 = vmatprep.subr.mxu0 %v1795
        %2125 = vmatpush1.msra.mxu0 %v1794
        %2126 = vmatprep.subr.mxu0 %v1743
        %2127 = vmatpush1.msra.mxu0 %v1742
        %2128 = vmatprep.subr.mxu0 %v1739
        %2129 = vmatpush1.msra.mxu0 %v1738
        %2130 = vmatprep.subr.mxu0 %v1735
        %2131 = vmatpush1.msra.mxu0 %v1734
        %2132 = vmatprep.subr.mxu0 %v1731
        %2133 = vmatpush1.msra.mxu0 %v1730
        %2134 = vmatprep.subr.mxu0 %v1679
        %2135 = vmatpush1.msra.mxu0 %v1678
        %2136 = vmatprep.subr.mxu0 %v1675
        %2137 = vmatpush1.msra.mxu0 %v1674
        %2138 = vmatprep.subr.mxu0 %v1671
        %2139 = vmatpush1.msra.mxu0 %v1670
        %2140 = vmatprep.subr.mxu0 %v1667
        %2141 = vmatpush1.msra.mxu0 %v1666
        %2142 = vmatprep.subr.mxu0 %v1615
        %2143 = vmatpush1.msra.mxu0 %v1614
        %2144 = vmatprep.subr.mxu0 %v1611
        %2145 = vmatpush1.msra.mxu0 %v1610
        %2146 = vmatprep.subr.mxu0 %v1607
        %2147 = vmatpush1.msra.mxu0 %v1606
        %2148 = vmatprep.subr.mxu0 %v1603
        %2149 = vmatpush1.msra.mxu0 %v1602
        %2150 = vmatprep.subr.mxu0 %v2015
        %2151 = vmatpush2.msra.mxu0 %v2014
        %2152 = vmatprep.subr.mxu0 %v2011
        %2153 = vmatpush2.msra.mxu0 %v2010
        %2154 = vmatprep.subr.mxu0 %v2007
        %2155 = vmatpush2.msra.mxu0 %v2006
        %2156 = vmatprep.subr.mxu0 %v2003
        %2157 = vmatpush2.msra.mxu0 %v2002
        %2158 = vmatprep.subr.mxu0 %v1951
        %2159 = vmatpush2.msra.mxu0 %v1950
        %2160 = vmatprep.subr.mxu0 %v1947
        %2161 = vmatpush2.msra.mxu0 %v1946
        %2162 = vmatprep.subr.mxu0 %v1943
        %2163 = vmatpush2.msra.mxu0 %v1942
        %2164 = vmatprep.subr.mxu0 %v1939
        %2165 = vmatpush2.msra.mxu0 %v1938
        %2166 = vmatprep.subr.mxu0 %v1887
        %2167 = vmatpush2.msra.mxu0 %v1886
        %2168 = vmatprep.subr.mxu0 %v1883
        %2169 = vmatpush2.msra.mxu0 %v1882
        %2170 = vmatprep.subr.mxu0 %v1879
        %2171 = vmatpush2.msra.mxu0 %v1878
        %2172 = vmatprep.subr.mxu0 %v1875
        %2173 = vmatpush2.msra.mxu0 %v1874
        %2174 = vmatprep.subr.mxu0 %v1823
        %2175 = vmatpush2.msra.mxu0 %v1822
        %2176 = vmatprep.subr.mxu0 %v1819
        %2177 = vmatpush2.msra.mxu0 %v1818
        %2178 = vmatprep.subr.mxu0 %v1815
        %2179 = vmatpush2.msra.mxu0 %v1814
        %2180 = vmatprep.subr.mxu0 %v1811
        %2181 = vmatpush2.msra.mxu0 %v1810
        %2182 = vmatprep.mubr.f32.mxu0 %v1543
        %2183 = vmatmul.mubr.f32.gmra.mxu0 %v1542
        %v2184 = vpop.f32.mrf.mxu0
        %v2185 = vadd.f32 %v2089, %v2184
        %v2186 = vpop.f32.mrf.mxu0
        %v2187 = vadd.f32 %v2089, %v2186
        %2188 = vmatprep.mubr.f32.mxu0 %v1546
        %2189 = vmatmul.mubr.f32.gmra.mxu0 %v1545
        %v2190 = vpop.f32.mrf.mxu0
        %v2191 = vadd.f32 %v2094, %v2190
        %v2192 = vpop.f32.mrf.mxu0
        %v2193 = vadd.f32 %v2094, %v2192
        %2194 = vmatprep.mubr.f32.mxu0 %v1549
        %2195 = vmatmul.mubr.f32.gmra.mxu0 %v1548
        %v2196 = vpop.f32.mrf.mxu0
        %v2197 = vadd.f32 %v2099, %v2196
        %v2198 = vpop.f32.mrf.mxu0
        %v2199 = vadd.f32 %v2099, %v2198
        %2200 = vmatprep.mubr.f32.mxu0 %v1552
        %2201 = vmatmul.mubr.f32.gmra.mxu0 %v1551
        %v2202 = vpop.f32.mrf.mxu0
        %v2203 = vadd.f32 %v2104, %v2202
        %v2204 = vpop.f32.mrf.mxu0
        %v2205 = vadd.f32 %v2104, %v2204
        %2206 = vdwg.mxu0
        %2207 = vmatprep.subr.mxu0 0.0
        %2208 = vmatpush1.msra.mxu0 0.0
        %2209 = vmatprep.subr.mxu0 0.0
        %2210 = vmatpush1.msra.mxu0 0.0
        %2211 = vmatprep.subr.mxu0 0.0
        %2212 = vmatpush1.msra.mxu0 0.0
        %2213 = vmatprep.subr.mxu0 0.0
        %2214 = vmatpush1.msra.mxu0 0.0
        %2215 = vmatprep.subr.mxu0 0.0
        %2216 = vmatpush1.msra.mxu0 0.0
        %2217 = vmatprep.subr.mxu0 0.0
        %2218 = vmatpush1.msra.mxu0 0.0
        %2219 = vmatprep.subr.mxu0 0.0
        %2220 = vmatpush1.msra.mxu0 0.0
        %2221 = vmatprep.subr.mxu0 0.0
        %2222 = vmatpush1.msra.mxu0 0.0
        %2223 = vmatprep.subr.mxu0 0.0
        %2224 = vmatpush1.msra.mxu0 0.0
        %2225 = vmatprep.subr.mxu0 0.0
        %2226 = vmatpush1.msra.mxu0 0.0
        %2227 = vmatprep.subr.mxu0 0.0
        %2228 = vmatpush1.msra.mxu0 0.0
        %2229 = vmatprep.subr.mxu0 0.0
        %2230 = vmatpush1.msra.mxu0 0.0
        %2231 = vmatprep.subr.mxu0 %v2079
        %2232 = vmatpush1.msra.mxu0 %v2078
        %2233 = vmatprep.subr.mxu0 %v2075
        %2234 = vmatpush1.msra.mxu0 %v2074
        %2235 = vmatprep.subr.mxu0 %v2071
        %2236 = vmatpush1.msra.mxu0 %v2070
        %2237 = vmatprep.subr.mxu0 %v2067
        %2238 = vmatpush1.msra.mxu0 %v2066
        %2239 = vmatprep.subr.mxu0 0.0
        %2240 = vmatpush2.msra.mxu0 0.0
        %2241 = vmatprep.subr.mxu0 0.0
        %2242 = vmatpush2.msra.mxu0 0.0
        %2243 = vmatprep.subr.mxu0 0.0
        %2244 = vmatpush2.msra.mxu0 0.0
        %2245 = vmatprep.subr.mxu0 0.0
        %2246 = vmatpush2.msra.mxu0 0.0
        %2247 = vmatprep.subr.mxu0 0.0
        %2248 = vmatpush2.msra.mxu0 0.0
        %2249 = vmatprep.subr.mxu0 0.0
        %2250 = vmatpush2.msra.mxu0 0.0
        %2251 = vmatprep.subr.mxu0 0.0
        %2252 = vmatpush2.msra.mxu0 0.0
        %2253 = vmatprep.subr.mxu0 0.0
        %2254 = vmatpush2.msra.mxu0 0.0
        %2255 = vmatprep.subr.mxu0 0.0
        %2256 = vmatpush2.msra.mxu0 0.0
        %2257 = vmatprep.subr.mxu0 0.0
        %2258 = vmatpush2.msra.mxu0 0.0
        %2259 = vmatprep.subr.mxu0 0.0
        %2260 = vmatpush2.msra.mxu0 0.0
        %2261 = vmatprep.subr.mxu0 0.0
        %2262 = vmatpush2.msra.mxu0 0.0
        %2263 = vmatprep.subr.mxu0 0.0
        %2264 = vmatpush2.msra.mxu0 0.0
        %2265 = vmatprep.subr.mxu0 0.0
        %2266 = vmatpush2.msra.mxu0 0.0
        %2267 = vmatprep.subr.mxu0 0.0
        %2268 = vmatpush2.msra.mxu0 0.0
        %2269 = vmatprep.subr.mxu0 0.0
        %2270 = vmatpush2.msra.mxu0 0.0
        %2271 = vmatprep.mubr.f32.mxu0 0.0
        %2272 = vmatmul.mubr.f32.gmra.mxu0 %v2107
        %v2273 = vpop.f32.mrf.mxu0
        %v2274 = vadd.f32 %v2185, %v2273
        %v2275 = vpop.f32.mrf.mxu0
        %v2276 = vadd.f32 %v2187, %v2275
        %2277 = vmatprep.mubr.f32.mxu0 0.0
        %2278 = vmatmul.mubr.f32.gmra.mxu0 %v2110
        %v2279 = vpop.f32.mrf.mxu0
        %v2280 = vadd.f32 %v2191, %v2279
        %v2281 = vpop.f32.mrf.mxu0
        %v2282 = vadd.f32 %v2193, %v2281
        %2283 = vmatprep.mubr.f32.mxu0 0.0
        %2284 = vmatmul.mubr.f32.gmra.mxu0 %v2113
        %v2285 = vpop.f32.mrf.mxu0
        %v2286 = vadd.f32 %v2197, %v2285
        %v2287 = vpop.f32.mrf.mxu0
        %v2288 = vadd.f32 %v2199, %v2287
        %2289 = vmatprep.mubr.f32.mxu0 0.0
        %2290 = vmatmul.mubr.f32.gmra.mxu0 %v2116
        %v2291 = vpop.f32.mrf.mxu0
        %v2292 = vadd.f32 %v2203, %v2291
        %v2293 = vpop.f32.mrf.mxu0
        %v2294 = vadd.f32 %v2205, %v2293
        %2295 = vdwg.mxu0
        %2296 = vmatprep.subr.mxu0 %v1809
        %2297 = vmatpush1.msra.mxu0 %v1808
        %2298 = vmatprep.subr.mxu0 %v1805
        %2299 = vmatpush1.msra.mxu0 %v1804
        %2300 = vmatprep.subr.mxu0 %v1801
        %2301 = vmatpush1.msra.mxu0 %v1800
        %2302 = vmatprep.subr.mxu0 %v1797
        %2303 = vmatpush1.msra.mxu0 %v1796
        %2304 = vmatprep.subr.mxu0 %v1745
        %2305 = vmatpush1.msra.mxu0 %v1744
        %2306 = vmatprep.subr.mxu0 %v1741
        %2307 = vmatpush1.msra.mxu0 %v1740
        %2308 = vmatprep.subr.mxu0 %v1737
        %2309 = vmatpush1.msra.mxu0 %v1736
        %2310 = vmatprep.subr.mxu0 %v1733
        %2311 = vmatpush1.msra.mxu0 %v1732
        %2312 = vmatprep.subr.mxu0 %v1681
        %2313 = vmatpush1.msra.mxu0 %v1680
        %2314 = vmatprep.subr.mxu0 %v1677
        %2315 = vmatpush1.msra.mxu0 %v1676
        %2316 = vmatprep.subr.mxu0 %v1673
        %2317 = vmatpush1.msra.mxu0 %v1672
        %2318 = vmatprep.subr.mxu0 %v1669
        %2319 = vmatpush1.msra.mxu0 %v1668
        %2320 = vmatprep.subr.mxu0 %v1617
        %2321 = vmatpush1.msra.mxu0 %v1616
        %2322 = vmatprep.subr.mxu0 %v1613
        %2323 = vmatpush1.msra.mxu0 %v1612
        %2324 = vmatprep.subr.mxu0 %v1609
        %2325 = vmatpush1.msra.mxu0 %v1608
        %2326 = vmatprep.subr.mxu0 %v1605
        %2327 = vmatpush1.msra.mxu0 %v1604
        %2328 = vmatprep.subr.mxu0 %v2017
        %2329 = vmatpush2.msra.mxu0 %v2016
        %2330 = vmatprep.subr.mxu0 %v2013
        %2331 = vmatpush2.msra.mxu0 %v2012
        %2332 = vmatprep.subr.mxu0 %v2009
        %2333 = vmatpush2.msra.mxu0 %v2008
        %2334 = vmatprep.subr.mxu0 %v2005
        %2335 = vmatpush2.msra.mxu0 %v2004
        %2336 = vmatprep.subr.mxu0 %v1953
        %2337 = vmatpush2.msra.mxu0 %v1952
        %2338 = vmatprep.subr.mxu0 %v1949
        %2339 = vmatpush2.msra.mxu0 %v1948
        %2340 = vmatprep.subr.mxu0 %v1945
        %2341 = vmatpush2.msra.mxu0 %v1944
        %2342 = vmatprep.subr.mxu0 %v1941
        %2343 = vmatpush2.msra.mxu0 %v1940
        %2344 = vmatprep.subr.mxu0 %v1889
        %2345 = vmatpush2.msra.mxu0 %v1888
        %2346 = vmatprep.subr.mxu0 %v1885
        %2347 = vmatpush2.msra.mxu0 %v1884
        %2348 = vmatprep.subr.mxu0 %v1881
        %2349 = vmatpush2.msra.mxu0 %v1880
        %2350 = vmatprep.subr.mxu0 %v1877
        %2351 = vmatpush2.msra.mxu0 %v1876
        %2352 = vmatprep.subr.mxu0 %v1825
        %2353 = vmatpush2.msra.mxu0 %v1824
        %2354 = vmatprep.subr.mxu0 %v1821
        %2355 = vmatpush2.msra.mxu0 %v1820
        %2356 = vmatprep.subr.mxu0 %v1817
        %2357 = vmatpush2.msra.mxu0 %v1816
        %2358 = vmatprep.subr.mxu0 %v1813
        %2359 = vmatpush2.msra.mxu0 %v1812
        %2360 = vmatprep.mubr.f32.mxu0 %v1543
        %2361 = vmatmul.mubr.f32.gmra.mxu0 %v1542
        %v2362 = vpop.f32.mrf.mxu0
        %v2363 = vadd.f32 %v2089, %v2362
        %v2364 = vpop.f32.mrf.mxu0
        %v2365 = vadd.f32 %v2089, %v2364
        %2366 = vmatprep.mubr.f32.mxu0 %v1546
        %2367 = vmatmul.mubr.f32.gmra.mxu0 %v1545
        %v2368 = vpop.f32.mrf.mxu0
        %v2369 = vadd.f32 %v2094, %v2368
        %v2370 = vpop.f32.mrf.mxu0
        %v2371 = vadd.f32 %v2094, %v2370
        %2372 = vmatprep.mubr.f32.mxu0 %v1549
        %2373 = vmatmul.mubr.f32.gmra.mxu0 %v1548
        %v2374 = vpop.f32.mrf.mxu0
        %v2375 = vadd.f32 %v2099, %v2374
        %v2376 = vpop.f32.mrf.mxu0
        %v2377 = vadd.f32 %v2099, %v2376
        %2378 = vmatprep.mubr.f32.mxu0 %v1552
        %2379 = vmatmul.mubr.f32.gmra.mxu0 %v1551
        %v2380 = vpop.f32.mrf.mxu0
        %v2381 = vadd.f32 %v2104, %v2380
        %v2382 = vpop.f32.mrf.mxu0
        %v2383 = vadd.f32 %v2104, %v2382
        %2384 = vdwg.mxu0
        %2385 = vmatprep.subr.mxu0 0.0
        %2386 = vmatpush1.msra.mxu0 0.0
        %2387 = vmatprep.subr.mxu0 0.0
        %2388 = vmatpush1.msra.mxu0 0.0
        %2389 = vmatprep.subr.mxu0 0.0
        %2390 = vmatpush1.msra.mxu0 0.0
        %2391 = vmatprep.subr.mxu0 0.0
        %2392 = vmatpush1.msra.mxu0 0.0
        %2393 = vmatprep.subr.mxu0 0.0
        %2394 = vmatpush1.msra.mxu0 0.0
        %2395 = vmatprep.subr.mxu0 0.0
        %2396 = vmatpush1.msra.mxu0 0.0
        %2397 = vmatprep.subr.mxu0 0.0
        %2398 = vmatpush1.msra.mxu0 0.0
        %2399 = vmatprep.subr.mxu0 0.0
        %2400 = vmatpush1.msra.mxu0 0.0
        %2401 = vmatprep.subr.mxu0 0.0
        %2402 = vmatpush1.msra.mxu0 0.0
        %2403 = vmatprep.subr.mxu0 0.0
        %2404 = vmatpush1.msra.mxu0 0.0
        %2405 = vmatprep.subr.mxu0 0.0
        %2406 = vmatpush1.msra.mxu0 0.0
        %2407 = vmatprep.subr.mxu0 0.0
        %2408 = vmatpush1.msra.mxu0 0.0
        %2409 = vmatprep.subr.mxu0 %v2081
        %2410 = vmatpush1.msra.mxu0 %v2080
        %2411 = vmatprep.subr.mxu0 %v2077
        %2412 = vmatpush1.msra.mxu0 %v2076
        %2413 = vmatprep.subr.mxu0 %v2073
        %2414 = vmatpush1.msra.mxu0 %v2072
        %2415 = vmatprep.subr.mxu0 %v2069
        %2416 = vmatpush1.msra.mxu0 %v2068
        %2417 = vmatprep.subr.mxu0 0.0
        %2418 = vmatpush2.msra.mxu0 0.0
        %2419 = vmatprep.subr.mxu0 0.0
        %2420 = vmatpush2.msra.mxu0 0.0
        %2421 = vmatprep.subr.mxu0 0.0
        %2422 = vmatpush2.msra.mxu0 0.0
        %2423 = vmatprep.subr.mxu0 0.0
        %2424 = vmatpush2.msra.mxu0 0.0
        %2425 = vmatprep.subr.mxu0 0.0
        %2426 = vmatpush2.msra.mxu0 0.0
        %2427 = vmatprep.subr.mxu0 0.0
        %2428 = vmatpush2.msra.mxu0 0.0
        %2429 = vmatprep.subr.mxu0 0.0
        %2430 = vmatpush2.msra.mxu0 0.0
        %2431 = vmatprep.subr.mxu0 0.0
        %2432 = vmatpush2.msra.mxu0 0.0
        %2433 = vmatprep.subr.mxu0 0.0
        %2434 = vmatpush2.msra.mxu0 0.0
        %2435 = vmatprep.subr.mxu0 0.0
        %2436 = vmatpush2.msra.mxu0 0.0
        %2437 = vmatprep.subr.mxu0 0.0
        %2438 = vmatpush2.msra.mxu0 0.0
        %2439 = vmatprep.subr.mxu0 0.0
        %2440 = vmatpush2.msra.mxu0 0.0
        %2441 = vmatprep.subr.mxu0 0.0
        %2442 = vmatpush2.msra.mxu0 0.0
        %2443 = vmatprep.subr.mxu0 0.0
        %2444 = vmatpush2.msra.mxu0 0.0
        %2445 = vmatprep.subr.mxu0 0.0
        %2446 = vmatpush2.msra.mxu0 0.0
        %2447 = vmatprep.subr.mxu0 0.0
        %2448 = vmatpush2.msra.mxu0 0.0
        %2449 = vmatprep.mubr.f32.mxu0 0.0
        %2450 = vmatmul.mubr.f32.gmra.mxu0 %v2107
        %v2451 = vpop.f32.mrf.mxu0
        %v2452 = vadd.f32 %v2363, %v2451
        %v2453 = vpop.f32.mrf.mxu0
        %v2454 = vadd.f32 %v2365, %v2453
        %2455 = vmatprep.mubr.f32.mxu0 0.0
        %2456 = vmatmul.mubr.f32.gmra.mxu0 %v2110
        %v2457 = vpop.f32.mrf.mxu0
        %v2458 = vadd.f32 %v2369, %v2457
        %v2459 = vpop.f32.mrf.mxu0
        %v2460 = vadd.f32 %v2371, %v2459
        %2461 = vmatprep.mubr.f32.mxu0 0.0
        %2462 = vmatmul.mubr.f32.gmra.mxu0 %v2113
        %v2463 = vpop.f32.mrf.mxu0
        %v2464 = vadd.f32 %v2375, %v2463
        %v2465 = vpop.f32.mrf.mxu0
        %v2466 = vadd.f32 %v2377, %v2465
        %2467 = vmatprep.mubr.f32.mxu0 0.0
        %2468 = vmatmul.mubr.f32.gmra.mxu0 %v2116
        %v2469 = vpop.f32.mrf.mxu0
        %v2470 = vadd.f32 %v2381, %v2469
        %v2471 = vpop.f32.mrf.mxu0
        %v2472 = vadd.f32 %v2383, %v2471
        %2473 = vdwg.mxu0
        %v2474 = vld [vmem:[%s2] sm:$0x77]
        %v2475 = vld [vmem:[%s2 + $0x8] sm:$0x77]
        %v2478 = vcombine.high %v2474, %v2474
        %v2479 = vcombine.high %v2475, %v2475
        %v2482 = vld [vmem:[%s405] sm:$0xff]
        %v2483 = vld [vmem:[%s405 + $0x8] sm:$0xff]
        %v2484 = vld [vmem:[%s405 + $0x10] sm:$0xff]
        %v2485 = vld [vmem:[%s405 + $0x18] sm:$0xff]
        %v2486 = vld [vmem:[%s405 + $0x20] sm:$0xff]
        %v2487 = vld [vmem:[%s405 + $0x28] sm:$0xff]
        %v2488 = vld [vmem:[%s405 + $0x30] sm:$0xff]
        %v2489 = vld [vmem:[%s405 + $0x38] sm:$0xff]
        %v2490 = vld [vmem:[%s405 + $0x40] sm:$0xff]
        %v2491 = vld [vmem:[%s405 + $0x48] sm:$0xff]
        %v2492 = vld [vmem:[%s405 + $0x50] sm:$0xff]
        %v2493 = vld [vmem:[%s405 + $0x58] sm:$0xff]
        %v2494 = vld [vmem:[%s405 + $0x60] sm:$0xff]
        %v2495 = vld [vmem:[%s405 + $0x68] sm:$0xff]
        %v2496 = vld [vmem:[%s405 + $0x70] sm:$0xff]
        %v2497 = vld [vmem:[%s405 + $0x78] sm:$0xff]
        %v2498 = vld [vmem:[%s405 + $0x80] sm:$0xff]
        %v2499 = vld [vmem:[%s405 + $0x88] sm:$0xff]
        %v2500 = vld [vmem:[%s405 + $0x90] sm:$0xff]
        %v2501 = vld [vmem:[%s405 + $0x98] sm:$0xff]
        %v2502 = vld [vmem:[%s405 + $0xa0] sm:$0xff]
        %v2503 = vld [vmem:[%s405 + $0xa8] sm:$0xff]
        %v2504 = vld [vmem:[%s405 + $0xb0] sm:$0xff]
        %v2505 = vld [vmem:[%s405 + $0xb8] sm:$0xff]
        %v2506 = vld [vmem:[%s405 + $0xc0] sm:$0xff]
        %v2507 = vld [vmem:[%s405 + $0xc8] sm:$0xff]
        %v2508 = vld [vmem:[%s405 + $0xd0] sm:$0xff]
        %v2509 = vld [vmem:[%s405 + $0xd8] sm:$0xff]
        %v2510 = vld [vmem:[%s405 + $0xe0] sm:$0xff]
        %v2511 = vld [vmem:[%s405 + $0xe8] sm:$0xff]
        %v2512 = vld [vmem:[%s405 + $0xf0] sm:$0xff]
        %v2513 = vld [vmem:[%s405 + $0xf8] sm:$0xff]
        %v2514 = vld [vmem:[%s405 + $0x100] sm:$0xff]
        %v2515 = vld [vmem:[%s405 + $0x108] sm:$0xff]
        %v2516 = vld [vmem:[%s405 + $0x110] sm:$0xff]
        %v2517 = vld [vmem:[%s405 + $0x118] sm:$0xff]
        %v2518 = vld [vmem:[%s405 + $0x120] sm:$0xff]
        %v2519 = vld [vmem:[%s405 + $0x128] sm:$0xff]
        %v2520 = vld [vmem:[%s405 + $0x130] sm:$0xff]
        %v2521 = vld [vmem:[%s405 + $0x138] sm:$0xff]
        %v2522 = vld [vmem:[%s405 + $0x140] sm:$0xff]
        %v2523 = vld [vmem:[%s405 + $0x148] sm:$0xff]
        %v2524 = vld [vmem:[%s405 + $0x150] sm:$0xff]
        %v2525 = vld [vmem:[%s405 + $0x158] sm:$0xff]
        %v2526 = vld [vmem:[%s405 + $0x160] sm:$0xff]
        %v2527 = vld [vmem:[%s405 + $0x168] sm:$0xff]
        %v2528 = vld [vmem:[%s405 + $0x170] sm:$0xff]
        %v2529 = vld [vmem:[%s405 + $0x178] sm:$0xff]
        %v2530 = vld [vmem:[%s405 + $0x180] sm:$0xff]
        %v2531 = vld [vmem:[%s405 + $0x188] sm:$0xff]
        %v2532 = vld [vmem:[%s405 + $0x190] sm:$0xff]
        %v2533 = vld [vmem:[%s405 + $0x198] sm:$0xff]
        %v2534 = vld [vmem:[%s405 + $0x1a0] sm:$0xff]
        %v2535 = vld [vmem:[%s405 + $0x1a8] sm:$0xff]
        %v2536 = vld [vmem:[%s405 + $0x1b0] sm:$0xff]
        %v2537 = vld [vmem:[%s405 + $0x1b8] sm:$0xff]
        %v2538 = vld [vmem:[%s405 + $0x1c0] sm:$0xff]
        %v2539 = vld [vmem:[%s405 + $0x1c8] sm:$0xff]
        %v2540 = vld [vmem:[%s405 + $0x1d0] sm:$0xff]
        %v2541 = vld [vmem:[%s405 + $0x1d8] sm:$0xff]
        %v2542 = vld [vmem:[%s405 + $0x1e0] sm:$0xff]
        %v2543 = vld [vmem:[%s405 + $0x1e8] sm:$0xff]
        %v2544 = vld [vmem:[%s405 + $0x1f0] sm:$0xff]
        %v2545 = vld [vmem:[%s405 + $0x1f8] sm:$0xff]
        %2546 = vmatprep.subr.mxu0 0.0
        %2547 = vmatpush1.msra.mxu0 %v2497
        %2548 = vmatprep.subr.mxu0 0.0
        %2549 = vmatpush1.msra.mxu0 %v2496
        %2550 = vmatprep.subr.mxu0 0.0
        %2551 = vmatpush1.msra.mxu0 %v2495
        %2552 = vmatprep.subr.mxu0 0.0
        %2553 = vmatpush1.msra.mxu0 %v2494
        %2554 = vmatprep.subr.mxu0 0.0
        %2555 = vmatpush1.msra.mxu0 %v2493
        %2556 = vmatprep.subr.mxu0 0.0
        %2557 = vmatpush1.msra.mxu0 %v2492
        %2558 = vmatprep.subr.mxu0 0.0
        %2559 = vmatpush1.msra.mxu0 %v2491
        %2560 = vmatprep.subr.mxu0 0.0
        %2561 = vmatpush1.msra.mxu0 %v2490
        %2562 = vmatprep.subr.mxu0 0.0
        %2563 = vmatpush1.msra.mxu0 %v2489
        %2564 = vmatprep.subr.mxu0 0.0
        %2565 = vmatpush1.msra.mxu0 %v2488
        %2566 = vmatprep.subr.mxu0 0.0
        %2567 = vmatpush1.msra.mxu0 %v2487
        %2568 = vmatprep.subr.mxu0 0.0
        %2569 = vmatpush1.msra.mxu0 %v2486
        %2570 = vmatprep.subr.mxu0 0.0
        %2571 = vmatpush1.msra.mxu0 %v2485
        %2572 = vmatprep.subr.mxu0 0.0
        %2573 = vmatpush1.msra.mxu0 %v2484
        %2574 = vmatprep.subr.mxu0 0.0
        %2575 = vmatpush1.msra.mxu0 %v2483
        %2576 = vmatprep.subr.mxu0 0.0
        %2577 = vmatpush1.msra.mxu0 %v2482
        %2578 = vmatprep.subr.mxu0 0.0
        %2579 = vmatpush2.msra.mxu0 %v2513
        %2580 = vmatprep.subr.mxu0 0.0
        %2581 = vmatpush2.msra.mxu0 %v2512
        %2582 = vmatprep.subr.mxu0 0.0
        %2583 = vmatpush2.msra.mxu0 %v2511
        %2584 = vmatprep.subr.mxu0 0.0
        %2585 = vmatpush2.msra.mxu0 %v2510
        %2586 = vmatprep.subr.mxu0 0.0
        %2587 = vmatpush2.msra.mxu0 %v2509
        %2588 = vmatprep.subr.mxu0 0.0
        %2589 = vmatpush2.msra.mxu0 %v2508
        %2590 = vmatprep.subr.mxu0 0.0
        %2591 = vmatpush2.msra.mxu0 %v2507
        %2592 = vmatprep.subr.mxu0 0.0
        %2593 = vmatpush2.msra.mxu0 %v2506
        %2594 = vmatprep.subr.mxu0 0.0
        %2595 = vmatpush2.msra.mxu0 %v2505
        %2596 = vmatprep.subr.mxu0 0.0
        %2597 = vmatpush2.msra.mxu0 %v2504
        %2598 = vmatprep.subr.mxu0 0.0
        %2599 = vmatpush2.msra.mxu0 %v2503
        %2600 = vmatprep.subr.mxu0 0.0
        %2601 = vmatpush2.msra.mxu0 %v2502
        %2602 = vmatprep.subr.mxu0 0.0
        %2603 = vmatpush2.msra.mxu0 %v2501
        %2604 = vmatprep.subr.mxu0 0.0
        %2605 = vmatpush2.msra.mxu0 %v2500
        %2606 = vmatprep.subr.mxu0 0.0
        %2607 = vmatpush2.msra.mxu0 %v2499
        %2608 = vmatprep.subr.mxu0 0.0
        %2609 = vmatpush2.msra.mxu0 %v2498
        %2610 = vmatprep.mubr.f32.mxu0 %v2276
        %2611 = vmatmul.mubr.f32.gmra.mxu0 %v2274
        %v2612 = vpop.f32.mrf.mxu0
        %v2613 = vadd.f32 0.0, %v2612
        %v2614 = vpop.f32.mrf.mxu0
        %2615 = vmatprep.mubr.f32.mxu0 %v2282
        %2616 = vmatmul.mubr.f32.gmra.mxu0 %v2280
        %v2617 = vpop.f32.mrf.mxu0
        %v2618 = vadd.f32 0.0, %v2617
        %v2619 = vpop.f32.mrf.mxu0
        %2620 = vmatprep.mubr.f32.mxu0 %v2288
        %2621 = vmatmul.mubr.f32.gmra.mxu0 %v2286
        %v2622 = vpop.f32.mrf.mxu0
        %v2623 = vadd.f32 0.0, %v2622
        %v2624 = vpop.f32.mrf.mxu0
        %2625 = vmatprep.mubr.f32.mxu0 %v2294
        %2626 = vmatmul.mubr.f32.gmra.mxu0 %v2292
        %v2627 = vpop.f32.mrf.mxu0
        %v2628 = vadd.f32 0.0, %v2627
        %v2629 = vpop.f32.mrf.mxu0
        %2630 = vmatprep.mubr.f32.mxu0 %v2478
        %2631 = vmatmul.mubr.f32.gmra.mxu0 %v2474
        %v2632 = vpop.f32.mrf.mxu0
        %v2633 = vadd.f32 0.0, %v2632
        %v2634 = vpop.f32.mrf.mxu0
        %2635 = vdwg.mxu0
        %2636 = vmatprep.subr.mxu0 0.0
        %2637 = vmatpush1.msra.mxu0 %v2529
        %2638 = vmatprep.subr.mxu0 0.0
        %2639 = vmatpush1.msra.mxu0 %v2528
        %2640 = vmatprep.subr.mxu0 0.0
        %2641 = vmatpush1.msra.mxu0 %v2527
        %2642 = vmatprep.subr.mxu0 0.0
        %2643 = vmatpush1.msra.mxu0 %v2526
        %2644 = vmatprep.subr.mxu0 0.0
        %2645 = vmatpush1.msra.mxu0 %v2525
        %2646 = vmatprep.subr.mxu0 0.0
        %2647 = vmatpush1.msra.mxu0 %v2524
        %2648 = vmatprep.subr.mxu0 0.0
        %2649 = vmatpush1.msra.mxu0 %v2523
        %2650 = vmatprep.subr.mxu0 0.0
        %2651 = vmatpush1.msra.mxu0 %v2522
        %2652 = vmatprep.subr.mxu0 0.0
        %2653 = vmatpush1.msra.mxu0 %v2521
        %2654 = vmatprep.subr.mxu0 0.0
        %2655 = vmatpush1.msra.mxu0 %v2520
        %2656 = vmatprep.subr.mxu0 0.0
        %2657 = vmatpush1.msra.mxu0 %v2519
        %2658 = vmatprep.subr.mxu0 0.0
        %2659 = vmatpush1.msra.mxu0 %v2518
        %2660 = vmatprep.subr.mxu0 0.0
        %2661 = vmatpush1.msra.mxu0 %v2517
        %2662 = vmatprep.subr.mxu0 0.0
        %2663 = vmatpush1.msra.mxu0 %v2516
        %2664 = vmatprep.subr.mxu0 0.0
        %2665 = vmatpush1.msra.mxu0 %v2515
        %2666 = vmatprep.subr.mxu0 0.0
        %2667 = vmatpush1.msra.mxu0 %v2514
        %2668 = vmatprep.subr.mxu0 0.0
        %2669 = vmatpush2.msra.mxu0 %v2545
        %2670 = vmatprep.subr.mxu0 0.0
        %2671 = vmatpush2.msra.mxu0 %v2544
        %2672 = vmatprep.subr.mxu0 0.0
        %2673 = vmatpush2.msra.mxu0 %v2543
        %2674 = vmatprep.subr.mxu0 0.0
        %2675 = vmatpush2.msra.mxu0 %v2542
        %2676 = vmatprep.subr.mxu0 0.0
        %2677 = vmatpush2.msra.mxu0 %v2541
        %2678 = vmatprep.subr.mxu0 0.0
        %2679 = vmatpush2.msra.mxu0 %v2540
        %2680 = vmatprep.subr.mxu0 0.0
        %2681 = vmatpush2.msra.mxu0 %v2539
        %2682 = vmatprep.subr.mxu0 0.0
        %2683 = vmatpush2.msra.mxu0 %v2538
        %2684 = vmatprep.subr.mxu0 0.0
        %2685 = vmatpush2.msra.mxu0 %v2537
        %2686 = vmatprep.subr.mxu0 0.0
        %2687 = vmatpush2.msra.mxu0 %v2536
        %2688 = vmatprep.subr.mxu0 0.0
        %2689 = vmatpush2.msra.mxu0 %v2535
        %2690 = vmatprep.subr.mxu0 0.0
        %2691 = vmatpush2.msra.mxu0 %v2534
        %2692 = vmatprep.subr.mxu0 0.0
        %2693 = vmatpush2.msra.mxu0 %v2533
        %2694 = vmatprep.subr.mxu0 0.0
        %2695 = vmatpush2.msra.mxu0 %v2532
        %2696 = vmatprep.subr.mxu0 0.0
        %2697 = vmatpush2.msra.mxu0 %v2531
        %2698 = vmatprep.subr.mxu0 0.0
        %2699 = vmatpush2.msra.mxu0 %v2530
        %2700 = vmatprep.mubr.f32.mxu0 %v2454
        %2701 = vmatmul.mubr.f32.gmra.mxu0 %v2452
        %v2702 = vpop.f32.mrf.mxu0
        %v2703 = vadd.f32 %v2613, %v2702
        %v2704 = vpop.f32.mrf.mxu0
        %2705 = vmatprep.mubr.f32.mxu0 %v2460
        %2706 = vmatmul.mubr.f32.gmra.mxu0 %v2458
        %v2707 = vpop.f32.mrf.mxu0
        %v2708 = vadd.f32 %v2618, %v2707
        %v2709 = vpop.f32.mrf.mxu0
        %2710 = vmatprep.mubr.f32.mxu0 %v2466
        %2711 = vmatmul.mubr.f32.gmra.mxu0 %v2464
        %v2712 = vpop.f32.mrf.mxu0
        %v2713 = vadd.f32 %v2623, %v2712
        %v2714 = vpop.f32.mrf.mxu0
        %2715 = vmatprep.mubr.f32.mxu0 %v2472
        %2716 = vmatmul.mubr.f32.gmra.mxu0 %v2470
        %v2717 = vpop.f32.mrf.mxu0
        %v2718 = vadd.f32 %v2628, %v2717
        %v2719 = vpop.f32.mrf.mxu0
        %2720 = vmatprep.mubr.f32.mxu0 %v2479
        %2721 = vmatmul.mubr.f32.gmra.mxu0 %v2475
        %v2722 = vpop.f32.mrf.mxu0
        %v2723 = vadd.f32 %v2633, %v2722
        %v2724 = vpop.f32.mrf.mxu0
        %2725 = vdwg.mxu0
        %v2726 = vadd.f32 %v2723, 1e-05
        %v2727 = vlaneseq
        %v2728 = vshrl.u32 %v2727, 7
        %v2729 = vsub.s32 2, %v2728
        %v2730 = vrot.slane %v2726, %v2729
        %v2731 = vrcp.pop %v2730
        %v2732 = vmul.f32 %v2703, %v2731
        %v2733 = vmul.f32 %v2708, %v2731
        %v2734 = vmul.f32 %v2713, %v2731
        %v2735 = vmul.f32 %v2718, %v2731
        %vm2736 = vcmask 15360
        %2737 = vst.msk [vmem:[%s410] sm:$0xff] %vm2736, %v2732
        %2738 = vst.msk [vmem:[%s410 + $0x8] sm:$0xff] %vm2736, %v2733
        %2739 = vst.msk [vmem:[%s410 + $0x10] sm:$0xff] %vm2736, %v2734
        %2740 = vst.msk [vmem:[%s410 + $0x18] sm:$0xff] %vm2736, %v2735
        %v2741 = vmul.f32 %v2723, %v2731
        %vm2742 = vcmask 9216
        %2743 = vst.msk [vmem:[%s414] sm:$0x3] %vm2742, %v2741
        %p2744 = scmp.lt.s32.totalorder %s21, 1
        %s2745 = scalar_select %p2744, %s21, 1
        %s2746 = smul.addr %s2745, 4
        %s2747 = smul.addr %s2746, 8
        %s2748 = scalar_lea.vmem %s8, %s2747
        %p2749 = scmp.lt.s32.totalorder %s21, 1
        %s2750 = scalar_select %p2749, %s21, 1
        %s2751 = smul.addr %s2750, 2
        %s2752 = scalar_lea.vmem %s9, %s2751
        // Predicated region
        $region76: #{feature_aggregate_forward.1} parent=70 // pred_check
          %p2753 = pneg %p217
        $region77: #{feature_aggregate_forward.1} parent=70 // pred_check_branch
          %2755 = sbr.rel (%p2753) target = $region79
        $region78: #{feature_aggregate_forward.1} parent=70 // pred_region
          _
        $region79: #{feature_aggregate_forward.1} parent=70 // pred_fallthru
          _
        // Predicated region
        $region80: #{feature_aggregate_forward.1} parent=70 // pred_check
          %p2756 = pneg %p243
        $region81: #{feature_aggregate_forward.1} parent=70 // pred_check_branch
          %2758 = sbr.rel (%p2756) target = $region83
        $region82: #{feature_aggregate_forward.1} parent=70 // pred_region
          _
        $region83: #{feature_aggregate_forward.1} parent=70 // pred_fallthru
          _
      $region71: #{feature_aggregate_forward.1} parent=5 // pred_fallthru
        _
      %p2759 = scmp.le.s32.totalorder 2, %s16
      // Predicated region
      $region84: #{feature_aggregate_forward.1} parent=5 // pred_check
        %p2760 = pneg %p2759
      $region85: #{feature_aggregate_forward.1} parent=5 // pred_check_branch
        %2762 = sbr.rel (%p2760) target = $region87
      $region86: #{feature_aggregate_forward.1} parent=5 // pred_region
        %s2763 = ssub.s32 %s16, 2
        // Predicated region
        $region88: #{feature_aggregate_forward.1} parent=86 // pred_check
          %p2764 = pneg %p223
        $region89: #{feature_aggregate_forward.1} parent=86 // pred_check_branch
          %2766 = sbr.rel (%p2764) target = $region91
        $region90: #{feature_aggregate_forward.1} parent=86 // pred_region
          %p2767 = scmp.lt.s32.totalorder %s22, 1
          %s2768 = scalar_select %p2767, %s22, 1
          %s2769 = smul.addr %s2768, 4
          %s2770 = smul.addr %s2769, 8
          %s2771 = scalar_lea.vmem %s8, %s2770
        $region91: #{feature_aggregate_forward.1} parent=86 // pred_fallthru
          _
        // Predicated region
        $region92: #{feature_aggregate_forward.1} parent=86 // pred_check
          %p2772 = pneg %p249
        $region93: #{feature_aggregate_forward.1} parent=86 // pred_check_branch
          %2774 = sbr.rel (%p2772) target = $region95
        $region94: #{feature_aggregate_forward.1} parent=86 // pred_region
          %p2775 = scmp.lt.s32.totalorder %s22, 1
          %s2776 = scalar_select %p2775, %s22, 1
          %s2777 = smul.addr %s2776, 2
          %s2778 = scalar_lea.vmem %s9, %s2777
        $region95: #{feature_aggregate_forward.1} parent=86 // pred_fallthru
          _
      $region87: #{feature_aggregate_forward.1} parent=5 // pred_fallthru
        _
    $region6: #{feature_aggregate_forward.1} parent=1 // loop_footer
      %s20 = sadd.s32 1, %s16
    $region7: #{feature_aggregate_forward.1} parent=1 // loop_footer_branch
      %15 = sbr.rel target = $region3
    $region8: #{feature_aggregate_forward.1} parent=1 // loop_exit
      _

</llo_original>
